<compile_context>
chip_gen: v7x
topology: tpu7x:2x2x1
jax: 0.10.0
libtpu: 0.0.40
codegen_flags: <defaults>
</compile_context>

<pallas_src>
import functools

import jax
import jax.numpy as jnp
import numpy as np
from jax.experimental import pallas as pl
from jax.experimental.pallas import tpu as pltpu

LN_EPS = 1e-5
_LANE = 128
_SUBLANE = 8
_NHEAD_PAD = 8   # sublane-padded head axis of the transposed output (rows 0/1 = F1/F2)


def _round_up(x, m):
    return (x + m - 1) // m * m


# ---------------------------------------------------------------------------
# Kernel: whole Critic forward for one batch tile, entirely in VMEM.
# ---------------------------------------------------------------------------
def _critic_kernel(h_ref, w0_ref, bias_ref, w1_ref, w2_ref, wfa_ref, wfbT_ref,
                   bfbT_ref, out_ref, *, hidden_dim, hidden_pad):
    cd = w1_ref.dtype            # matmul operand dtype (bf16 default, f32 optional)
    f32 = jnp.float32
    H, Hp = hidden_dim, hidden_pad

    biases = bias_ref[...]       # (8, 2*Hp) f32, packed bias/gamma/beta rows
    b0, g0, be0 = biases[0:1, :Hp], biases[1:2, :Hp], biases[2:3, :Hp]
    b1, b2 = biases[3:4, :Hp], biases[4:5, :Hp]
    bfa = biases[5:6, :]

    # --- trunk layer 0: one fused (bt, in_dim) @ (in_dim, Hp) matmul ---
    x = jnp.dot(h_ref[...], w0_ref[...], preferred_element_type=f32) + b0

    # --- LayerNorm over the real H features ---
    # Invariant (see _prepare_weights): W0 pad columns and b0/gamma/beta pad lanes are
    # exactly zero, so the padded lanes of x are zero and sum/H is the true mean.
    inv_h = 1.0 / H
    mu = jnp.sum(x, axis=-1, keepdims=True) * inv_h
    xc = x - mu
    if Hp != H:
        mask = jax.lax.broadcasted_iota(jnp.int32, (1, Hp), 1) < H
        xc = jnp.where(mask, xc, 0.0)
    var = jnp.sum(xc * xc, axis=-1, keepdims=True) * inv_h
    x = jnp.tanh(xc * jax.lax.rsqrt(var + LN_EPS) * g0 + be0)   # pad lanes -> tanh(0)=0
    x = x.astype(cd)                                            # live in bf16 between matmuls

    # --- trunk: Linear -> ReLU -> Linear -> ReLU ---
    x = jnp.maximum(jnp.dot(x, w1_ref[...], preferred_element_type=f32) + b1, 0.0).astype(cd)
    x = jnp.maximum(jnp.dot(x, w2_ref[...], preferred_element_type=f32) + b2, 0.0).astype(cd)

    # --- fused heads F1|F2: one (Hp, 2Hp) matmul + ReLU ---
    y = jnp.maximum(jnp.dot(x, wfa_ref[...], preferred_element_type=f32) + bfa, 0.0).astype(cd)

    # --- final layer, computed transposed: (8, 2Hp) x (bt, 2Hp)^T -> (8, bt) ---
    # Heads live on sublanes (row 0 = F1, row 1 = F2), batch on lanes -> lane-dense,
    # tiny output stream instead of a 128-lane garbage block.
    out = jax.lax.dot_general(wfbT_ref[...], y, (((1,), (1,)), ((), ())),
                              preferred_element_type=f32)
    out = out + bfbT_ref[...]                                   # (8, 1) broadcast over batch
    out_ref[...] = out.astype(out_ref.dtype)


# ---------------------------------------------------------------------------
# Weight preparation: pad to 128 lanes, fuse the two heads, pack the biases
# ---------------------------------------------------------------------------
def _prepare_weights(params, in_dim, compute_dtype):
    H = params["w1"].shape[0]
    Hp = _round_up(H, _LANE)
    cd = compute_dtype
    f32 = jnp.float32

    def pad2(a, rows, cols, dtype):
        a = jnp.asarray(a, dtype)
        return jnp.pad(a, ((0, rows - a.shape[0]), (0, cols - a.shape[1])))

    # NOTE: all padding below MUST remain exactly zero -- the in-kernel LayerNorm sums
    # over all Hp lanes and divides by the real H, which is only correct because the
    # padded lanes of layer-0's output are identically zero.
    w0 = pad2(params["w0"], in_dim, Hp, cd)
    w1 = pad2(params["w1"], Hp, Hp, cd)
    w2 = pad2(params["w2"], Hp, Hp, cd)

    # fused head layer A: cols [0:H] <- F1 hidden, cols [Hp:Hp+H] <- F2 hidden
    wfa = jnp.zeros((Hp, 2 * Hp), cd)
    wfa = wfa.at[:H, :H].set(params["wf1a"].astype(cd))
    wfa = wfa.at[:H, Hp:Hp + H].set(params["wf2a"].astype(cd))

    # packed bias/gamma/beta block (8, 2Hp): one DMA window instead of six
    bias = jnp.zeros((_SUBLANE, 2 * Hp), f32)
    bias = bias.at[0, :H].set(params["b0"][0].astype(f32))
    bias = bias.at[1, :H].set(params["ln_g"][0].astype(f32))
    bias = bias.at[2, :H].set(params["ln_b"][0].astype(f32))
    bias = bias.at[3, :H].set(params["b1"][0].astype(f32))
    bias = bias.at[4, :H].set(params["b2"][0].astype(f32))
    bias = bias.at[5, :H].set(params["bf1a"][0].astype(f32))
    bias = bias.at[5, Hp:Hp + H].set(params["bf2a"][0].astype(f32))

    # final head weights transposed: heads on sublanes (row 0 = F1, row 1 = F2)
    wfbT = jnp.zeros((_NHEAD_PAD, 2 * Hp), cd)
    wfbT = wfbT.at[0, :H].set(params["wf1b"][:, 0].astype(cd))
    wfbT = wfbT.at[1, Hp:Hp + H].set(params["wf2b"][:, 0].astype(cd))
    bfbT = jnp.zeros((_NHEAD_PAD, 1), f32)
    bfbT = bfbT.at[0, 0].set(params["bf1b"][0, 0].astype(f32))
    bfbT = bfbT.at[1, 0].set(params["bf2b"][0, 0].astype(f32))

    weights = [w0, bias, w1, w2, wfa, wfbT, bfbT]
    return weights, H, Hp


# ---------------------------------------------------------------------------
# Wrapper
# ---------------------------------------------------------------------------
def critic_forward(obs, z, action, params, *, batch_tile=512,
                   compute_dtype=jnp.bfloat16):
    obs_dim, z_dim, action_dim = obs.shape[-1], z.shape[-1], action.shape[-1]
    in_dim = obs_dim + z_dim + action_dim
    B = obs.shape[0]

    weights, H, Hp = _prepare_weights(params, in_dim, compute_dtype)

    # Single fused activation stream, cast once in the wrapper (halves bf16 input bytes).
    h_in = jnp.concatenate([obs, z, action], axis=-1).astype(compute_dtype)

    # Batch tile: the lane-dense transposed output needs bt to be a multiple of 128.
    # Batch is padded to a whole number of tiles, so no grid step touches OOB data.
    B128 = _round_up(B, _LANE)
    bt = max(_LANE, min(_round_up(batch_tile, _LANE), B128))
    if B128 >= 2 * _LANE:
        # keep >= 2 grid steps when the batch allows it (v7x has 2 TensorCores; the
        # batch axis is "parallel" so steps shard across them)
        bt = min(bt, _round_up(pl.cdiv(B128, 2), _LANE))
    Bp = _round_up(B, bt)
    if Bp != B:
        h_in = jnp.pad(h_in, ((0, Bp - B), (0, 0)))
    grid = (Bp // bt,)

    h_spec = pl.BlockSpec((bt, in_dim), lambda i: (i, 0))
    out_specs = pl.BlockSpec((_NHEAD_PAD, bt), lambda i: (0, i))
    out_shape = jax.ShapeDtypeStruct((_NHEAD_PAD, Bp), jnp.float32)

    weight_bytes = int(sum(w.size * w.dtype.itemsize for w in weights))
    act_bytes = int(h_in.size * h_in.dtype.itemsize)
    flops = 2 * Bp * (in_dim * Hp + 2 * Hp * Hp + Hp * (2 * Hp) + (2 * Hp) * _NHEAD_PAD)
    cost = pl.CostEstimate(flops=int(flops), transcendentals=int(Bp * Hp),
                           bytes_accessed=act_bytes + weight_bytes + _NHEAD_PAD * Bp * 4)

    # Per-generation VMEM budget (v5e/v6e: 128 MiB physical, v7x: 64 MiB).
    try:
        vmem_cap = int(pltpu.get_tpu_info().vmem_capacity_bytes)
    except Exception:
        vmem_cap = 64 << 20
    itemsize = np.dtype(compute_dtype).itemsize
    vmem_need = (2 * weight_bytes                      # weights (worst case double-buffered)
                 + 4 * bt * in_dim * itemsize          # input double buffers
                 + 4 * _NHEAD_PAD * bt * 4             # output double buffers
                 + 6 * bt * 2 * Hp * 4                 # live intermediates / spill headroom
                 + (4 << 20))
    vmem_limit = int(min(max(vmem_need, 16 << 20), int(vmem_cap * 0.85)))
    # TODO(synk): for very large hidden_dim (weights no longer VMEM-resident on v7x's
    #             64 MiB) add a fallback that tiles the Hp/2Hp weight dim over a grid axis.

    kernel = functools.partial(_critic_kernel, hidden_dim=H, hidden_pad=Hp)

    def run(single_buffer_weights):
        if single_buffer_weights:
            # constant-index weight blocks only need a single resident VMEM buffer
            w_specs = [pl.BlockSpec(w.shape, lambda i: (0, 0),
                                    pipeline_mode=pl.Buffered(1)) for w in weights]
        else:
            w_specs = [pl.BlockSpec(w.shape, lambda i: (0, 0)) for w in weights]
        return pl.pallas_call(
            kernel,
            grid_spec=pltpu.PrefetchScalarGridSpec(
                num_scalar_prefetch=0,
                grid=grid,
                in_specs=[h_spec] + w_specs,
                out_specs=out_specs,
            ),
            out_shape=out_shape,
            compiler_params=pltpu.CompilerParams(
                dimension_semantics=("parallel",),
                vmem_limit_bytes=vmem_limit,
            ),
            cost_estimate=cost,
        )(h_in, *weights)

    try:
        out = run(True)
    except Exception:
        # fallback if this Pallas version rejects pipeline_mode on the outer pipeline
        out = run(False)

    f1 = out[0, :B][:, None]
    f2 = out[1, :B][:, None]
    return f1, f2


# ---------------------------------------------------------------------------
# Parameters & pure-JAX reference
# ---------------------------------------------------------------------------
def init_params(key, obs_dim, z_dim, action_dim, hidden_dim):
    """Deterministic synthetic parameters (shapes match the PyTorch module)."""
    in_dim = obs_dim + z_dim + action_dim
    ks = jax.random.split(key, 8)

    def lin(k, fan_in, fan_out):
        w = jax.random.normal(k, (fan_in, fan_out), jnp.float32) / np.sqrt(fan_in)
        b = jnp.zeros((1, fan_out), jnp.float32)
        return w, b

    w0, b0 = lin(ks[0], in_dim, hidden_dim)
    w1, b1 = lin(ks[1], hidden_dim, hidden_dim)
    w2, b2 = lin(ks[2], hidden_dim, hidden_dim)
    wf1a, bf1a = lin(ks[3], hidden_dim, hidden_dim)
    wf1b, bf1b = lin(ks[4], hidden_dim, 1)
    wf2a, bf2a = lin(ks[5], hidden_dim, hidden_dim)
    wf2b, bf2b = lin(ks[6], hidden_dim, 1)

    return dict(
        w0=w0, b0=b0,
        ln_g=jnp.ones((1, hidden_dim), jnp.float32),
        ln_b=jnp.zeros((1, hidden_dim), jnp.float32),
        w1=w1, b1=b1, w2=w2, b2=b2,
        wf1a=wf1a, bf1a=bf1a, wf1b=wf1b, bf1b=bf1b,
        wf2a=wf2a, bf2a=bf2a, wf2b=wf2b, bf2b=bf2b,
    )


def critic_forward_ref(obs, z, action, params):
    """Pure-JAX f32 reference for correctness checking."""
    h = jnp.concatenate([obs, z, action], axis=-1).astype(jnp.float32)
    x = h @ params["w0"] + params["b0"]
    mu = jnp.mean(x, axis=-1, keepdims=True)
    var = jnp.mean((x - mu) ** 2, axis=-1, keepdims=True)
    x = (x - mu) / jnp.sqrt(var + LN_EPS)
    x = jnp.tanh(x * params["ln_g"] + params["ln_b"])
    x = jnp.maximum(x @ params["w1"] + params["b1"], 0.0)
    x = jnp.maximum(x @ params["w2"] + params["b2"], 0.0)
    y1 = jnp.maximum(x @ params["wf1a"] + params["bf1a"], 0.0)
    f1 = y1 @ params["wf1b"] + params["bf1b"]
    y2 = jnp.maximum(x @ params["wf2a"] + params["bf2a"], 0.0)
    f2 = y2 @ params["wf2b"] + params["bf2b"]
    return f1, f2


if __name__ == "__main__":
    obs_dim, z_dim, action_dim, hidden_dim = 24, 8, 6, 32

    key = jax.random.PRNGKey(0)
    k_obs, k_z, k_act, k_par = jax.random.split(key, 4)
    params = init_params(k_par, obs_dim, z_dim, action_dim, hidden_dim)

    # --- case 1: small batch (exercises batch padding 20 -> 128), exact f32 math ---
    batch = 20
    obs = jax.random.normal(k_obs, (batch, obs_dim), jnp.float32)
    z = jax.random.normal(k_z, (batch, z_dim), jnp.float32)
    action = jax.random.normal(k_act, (batch, action_dim), jnp.float32)
    assert z.shape[-1] == z_dim  # mirrors the PyTorch assert

    f1_ref, f2_ref = critic_forward_ref(obs, z, action, params)
    f1, f2 = critic_forward(obs, z, action, params, compute_dtype=jnp.float32)
    jax.block_until_ready((f1, f2))
    np.testing.assert_allclose(np.asarray(f1), np.asarray(f1_ref), rtol=1e-4, atol=1e-4)
    np.testing.assert_allclose(np.asarray(f2), np.asarray(f2_ref), rtol=1e-4, atol=1e-4)

    # --- case 2: multi-step grid (batch 300, tile 128 -> 3 grid steps), f32 math ---
    batch2 = 300
    kb = jax.random.split(key, 3)
    obs2 = jax.random.normal(kb[0], (batch2, obs_dim), jnp.float32)
    z2 = jax.random.normal(kb[1], (batch2, z_dim), jnp.float32)
    act2 = jax.random.normal(kb[2], (batch2, action_dim), jnp.float32)
    f1r_ref, f2r_ref = critic_forward_ref(obs2, z2, act2, params)
    f1r, f2r = critic_forward(obs2, z2, act2, params, batch_tile=128,
                              compute_dtype=jnp.float32)
    jax.block_until_ready((f1r, f2r))
    np.testing.assert_allclose(np.asarray(f1r), np.asarray(f1r_ref), rtol=1e-4, atol=1e-4)
    np.testing.assert_allclose(np.asarray(f2r), np.asarray(f2r_ref), rtol=1e-4, atol=1e-4)

    # --- case 3: default fast path (bf16 matmuls, f32 accumulation / elementwise) ---
    f1b, f2b = critic_forward(obs, z, action, params)
    jax.block_until_ready((f1b, f2b))
    np.testing.assert_allclose(np.asarray(f1b), np.asarray(f1_ref), rtol=5e-2, atol=5e-2)
    np.testing.assert_allclose(np.asarray(f2b), np.asarray(f2_ref), rtol=5e-2, atol=5e-2)

    print("KERNEL_OK")
</pallas_src>

<mosaic_0001>
module attributes {stable_mosaic.version = 11 : i64} {
  func.func @_critic_kernel(%arg0: i32, %arg1: memref<128x38xf32, #tpu.memory_space<vmem>>, %arg2: memref<38x128xf32, #tpu.memory_space<vmem>>, %arg3: memref<8x256xf32, #tpu.memory_space<vmem>>, %arg4: memref<128x128xf32, #tpu.memory_space<vmem>>, %arg5: memref<128x128xf32, #tpu.memory_space<vmem>>, %arg6: memref<128x256xf32, #tpu.memory_space<vmem>>, %arg7: memref<8x256xf32, #tpu.memory_space<vmem>>, %arg8: memref<8x1xf32, #tpu.memory_space<vmem>>, %arg9: memref<8x128xf32, #tpu.memory_space<vmem>>) attributes {dimension_semantics = [#tpu.dimension_semantics<parallel>], iteration_bounds = array<i64: 1>, scalar_prefetch = 0 : i64, scratch_operands = 0 : i64, tpu.core_type = #tpu.core_type<tc>, window_params = [{transform_indices = @transform_0, window_bounds = array<i64: 128, 38>}, {pipeline_mode = #tpu.pipeline_mode<synchronous>, transform_indices = @transform_1, window_bounds = array<i64: 38, 128>}, {pipeline_mode = #tpu.pipeline_mode<synchronous>, transform_indices = @transform_2, window_bounds = array<i64: 8, 256>}, {pipeline_mode = #tpu.pipeline_mode<synchronous>, transform_indices = @transform_3, window_bounds = array<i64: 128, 128>}, {pipeline_mode = #tpu.pipeline_mode<synchronous>, transform_indices = @transform_4, window_bounds = array<i64: 128, 128>}, {pipeline_mode = #tpu.pipeline_mode<synchronous>, transform_indices = @transform_5, window_bounds = array<i64: 128, 256>}, {pipeline_mode = #tpu.pipeline_mode<synchronous>, transform_indices = @transform_6, window_bounds = array<i64: 8, 256>}, {pipeline_mode = #tpu.pipeline_mode<synchronous>, transform_indices = @transform_7, window_bounds = array<i64: 8, 1>}, {transform_indices = @transform_8, window_bounds = array<i64: 8, 128>}]} {
    %c0 = arith.constant 0 : index
    %c0_0 = arith.constant 0 : index
    %0 = vector.load %arg3[%c0, %c0_0] : memref<8x256xf32, #tpu.memory_space<vmem>>, vector<8x256xf32>
    %1 = vector.extract_strided_slice %0 {offsets = [0, 0], sizes = [1, 128], strides = [1, 1]} : vector<8x256xf32> to vector<1x128xf32>
    %2 = vector.extract_strided_slice %0 {offsets = [1, 0], sizes = [1, 128], strides = [1, 1]} : vector<8x256xf32> to vector<1x128xf32>
    %3 = vector.extract_strided_slice %0 {offsets = [2, 0], sizes = [1, 128], strides = [1, 1]} : vector<8x256xf32> to vector<1x128xf32>
    %4 = vector.extract_strided_slice %0 {offsets = [3, 0], sizes = [1, 128], strides = [1, 1]} : vector<8x256xf32> to vector<1x128xf32>
    %5 = vector.extract_strided_slice %0 {offsets = [4, 0], sizes = [1, 128], strides = [1, 1]} : vector<8x256xf32> to vector<1x128xf32>
    %6 = vector.extract_strided_slice %0 {offsets = [5, 0], sizes = [1, 256], strides = [1, 1]} : vector<8x256xf32> to vector<1x256xf32>
    %c0_1 = arith.constant 0 : index
    %c0_2 = arith.constant 0 : index
    %7 = vector.load %arg1[%c0_1, %c0_2] : memref<128x38xf32, #tpu.memory_space<vmem>>, vector<128x38xf32>
    %c0_3 = arith.constant 0 : index
    %c0_4 = arith.constant 0 : index
    %8 = vector.load %arg2[%c0_3, %c0_4] : memref<38x128xf32, #tpu.memory_space<vmem>>, vector<38x128xf32>
    %cst = arith.constant dense<0.000000e+00> : vector<128x128xf32>
    %9 = tpu.matmul %7, %8, %cst {dimension_numbers = #tpu.dot_dimension_numbers<[1], [0], [0], [1], [0, 0, 1, 1], [], []>} : vector<128x38xf32>, vector<38x128xf32>, vector<128x128xf32> -> vector<128x128xf32>
    %10 = vector.broadcast %1 : vector<1x128xf32> to vector<128x128xf32>
    %11 = arith.addf %9, %10 : vector<128x128xf32>
    %cst_5 = arith.constant dense<0.000000e+00> : vector<128xf32>
    %12 = vector.multi_reduction <add>, %11, %cst_5 [1] : vector<128x128xf32> to vector<128xf32>
    %13 = vector.shape_cast %12 : vector<128xf32> to vector<128x1xf32>
    %cst_6 = arith.constant 3.125000e-02 : f32
    %14 = vector.broadcast %cst_6 : f32 to vector<128x1xf32>
    %15 = arith.mulf %13, %14 : vector<128x1xf32>
    %16 = vector.broadcast %15 : vector<128x1xf32> to vector<128x128xf32>
    %17 = arith.subf %11, %16 : vector<128x128xf32>
    %18 = tpu.iota {dimensions = array<i32: 1>} : vector<1x128xi32>
    %c32_i32 = arith.constant 32 : i32
    %19 = vector.broadcast %c32_i32 : i32 to vector<1x128xi32>
    %20 = arith.cmpi slt, %18, %19 : vector<1x128xi32>
    %cst_7 = arith.constant 0.000000e+00 : f32
    %21 = vector.shape_cast %20 : vector<1x128xi1> to vector<1x128xi1>
    %22 = vector.broadcast %21 : vector<1x128xi1> to vector<128x128xi1>
    %23 = vector.broadcast %cst_7 : f32 to vector<128x128xf32>
    %24 = arith.select %22, %17, %23 : vector<128x128xi1>, vector<128x128xf32>
    %25 = arith.mulf %24, %24 : vector<128x128xf32>
    %cst_8 = arith.constant dense<0.000000e+00> : vector<128xf32>
    %26 = vector.multi_reduction <add>, %25, %cst_8 [1] : vector<128x128xf32> to vector<128xf32>
    %27 = vector.shape_cast %26 : vector<128xf32> to vector<128x1xf32>
    %cst_9 = arith.constant 3.125000e-02 : f32
    %28 = vector.broadcast %cst_9 : f32 to vector<128x1xf32>
    %29 = arith.mulf %27, %28 : vector<128x1xf32>
    %cst_10 = arith.constant 9.99999974E-6 : f32
    %30 = vector.broadcast %cst_10 : f32 to vector<128x1xf32>
    %31 = arith.addf %29, %30 : vector<128x1xf32>
    %32 = math.rsqrt %31 : vector<128x1xf32>
    %33 = vector.broadcast %32 : vector<128x1xf32> to vector<128x128xf32>
    %34 = arith.mulf %24, %33 : vector<128x128xf32>
    %35 = vector.broadcast %2 : vector<1x128xf32> to vector<128x128xf32>
    %36 = arith.mulf %34, %35 : vector<128x128xf32>
    %37 = vector.broadcast %3 : vector<1x128xf32> to vector<128x128xf32>
    %38 = arith.addf %36, %37 : vector<128x128xf32>
    %39 = math.tanh %38 : vector<128x128xf32>
    %c0_11 = arith.constant 0 : index
    %c0_12 = arith.constant 0 : index
    %40 = vector.load %arg4[%c0_11, %c0_12] : memref<128x128xf32, #tpu.memory_space<vmem>>, vector<128x128xf32>
    %cst_13 = arith.constant dense<0.000000e+00> : vector<128x128xf32>
    %41 = tpu.matmul %39, %40, %cst_13 {dimension_numbers = #tpu.dot_dimension_numbers<[1], [0], [0], [1], [0, 0, 1, 1], [], []>} : vector<128x128xf32>, vector<128x128xf32>, vector<128x128xf32> -> vector<128x128xf32>
    %42 = vector.broadcast %4 : vector<1x128xf32> to vector<128x128xf32>
    %43 = arith.addf %41, %42 : vector<128x128xf32>
    %cst_14 = arith.constant 0.000000e+00 : f32
    %44 = vector.broadcast %cst_14 : f32 to vector<128x128xf32>
    %45 = arith.maximumf %43, %44 : vector<128x128xf32>
    %c0_15 = arith.constant 0 : index
    %c0_16 = arith.constant 0 : index
    %46 = vector.load %arg5[%c0_15, %c0_16] : memref<128x128xf32, #tpu.memory_space<vmem>>, vector<128x128xf32>
    %cst_17 = arith.constant dense<0.000000e+00> : vector<128x128xf32>
    %47 = tpu.matmul %45, %46, %cst_17 {dimension_numbers = #tpu.dot_dimension_numbers<[1], [0], [0], [1], [0, 0, 1, 1], [], []>} : vector<128x128xf32>, vector<128x128xf32>, vector<128x128xf32> -> vector<128x128xf32>
    %48 = vector.broadcast %5 : vector<1x128xf32> to vector<128x128xf32>
    %49 = arith.addf %47, %48 : vector<128x128xf32>
    %cst_18 = arith.constant 0.000000e+00 : f32
    %50 = vector.broadcast %cst_18 : f32 to vector<128x128xf32>
    %51 = arith.maximumf %49, %50 : vector<128x128xf32>
    %c0_19 = arith.constant 0 : index
    %c0_20 = arith.constant 0 : index
    %52 = vector.load %arg6[%c0_19, %c0_20] : memref<128x256xf32, #tpu.memory_space<vmem>>, vector<128x256xf32>
    %cst_21 = arith.constant dense<0.000000e+00> : vector<128x256xf32>
    %53 = tpu.matmul %51, %52, %cst_21 {dimension_numbers = #tpu.dot_dimension_numbers<[1], [0], [0], [1], [0, 0, 1, 1], [], []>} : vector<128x128xf32>, vector<128x256xf32>, vector<128x256xf32> -> vector<128x256xf32>
    %54 = vector.broadcast %6 : vector<1x256xf32> to vector<128x256xf32>
    %55 = arith.addf %53, %54 : vector<128x256xf32>
    %cst_22 = arith.constant 0.000000e+00 : f32
    %56 = vector.broadcast %cst_22 : f32 to vector<128x256xf32>
    %57 = arith.maximumf %55, %56 : vector<128x256xf32>
    %c0_23 = arith.constant 0 : index
    %c0_24 = arith.constant 0 : index
    %58 = vector.load %arg7[%c0_23, %c0_24] : memref<8x256xf32, #tpu.memory_space<vmem>>, vector<8x256xf32>
    %cst_25 = arith.constant dense<0.000000e+00> : vector<8x128xf32>
    %59 = tpu.matmul %58, %57, %cst_25 {dimension_numbers = #tpu.dot_dimension_numbers<[1], [1], [0], [0], [0, 0, 1, 0], [], []>} : vector<8x256xf32>, vector<128x256xf32>, vector<8x128xf32> -> vector<8x128xf32>
    %c0_26 = arith.constant 0 : index
    %c0_27 = arith.constant 0 : index
    %60 = vector.load %arg8[%c0_26, %c0_27] : memref<8x1xf32, #tpu.memory_space<vmem>>, vector<8x1xf32>
    %61 = vector.broadcast %60 : vector<8x1xf32> to vector<8x128xf32>
    %62 = arith.addf %59, %61 : vector<8x128xf32>
    %c0_28 = arith.constant 0 : index
    %c0_29 = arith.constant 0 : index
    %63 = vector.load %arg9[%c0_28, %c0_29] : memref<8x128xf32, #tpu.memory_space<vmem>>, vector<8x128xf32>
    tpu.vector_store %arg9[%c0_28, %c0_29], %62 {strides = array<i32>} : memref<8x128xf32, #tpu.memory_space<vmem>>, vector<8x128xf32>,
    return
  }
  func.func @transform_0(%arg0: i32) -> (i32, i32) {
    %c0_i32 = arith.constant 0 : i32
    %c0_i32_0 = arith.constant 0 : i32
    return %arg0, %c0_i32 : i32, i32
  }
  func.func @transform_1(%arg0: i32) -> (i32, i32) {
    %c0_i32 = arith.constant 0 : i32
    %c0_i32_0 = arith.constant 0 : i32
    %c0_i32_1 = arith.constant 0 : i32
    return %c0_i32, %c0_i32_0 : i32, i32
  }
  func.func @transform_2(%arg0: i32) -> (i32, i32) {
    %c0_i32 = arith.constant 0 : i32
    %c0_i32_0 = arith.constant 0 : i32
    %c0_i32_1 = arith.constant 0 : i32
    return %c0_i32, %c0_i32_0 : i32, i32
  }
  func.func @transform_3(%arg0: i32) -> (i32, i32) {
    %c0_i32 = arith.constant 0 : i32
    %c0_i32_0 = arith.constant 0 : i32
    %c0_i32_1 = arith.constant 0 : i32
    return %c0_i32, %c0_i32_0 : i32, i32
  }
  func.func @transform_4(%arg0: i32) -> (i32, i32) {
    %c0_i32 = arith.constant 0 : i32
    %c0_i32_0 = arith.constant 0 : i32
    %c0_i32_1 = arith.constant 0 : i32
    return %c0_i32, %c0_i32_0 : i32, i32
  }
  func.func @transform_5(%arg0: i32) -> (i32, i32) {
    %c0_i32 = arith.constant 0 : i32
    %c0_i32_0 = arith.constant 0 : i32
    %c0_i32_1 = arith.constant 0 : i32
    return %c0_i32, %c0_i32_0 : i32, i32
  }
  func.func @transform_6(%arg0: i32) -> (i32, i32) {
    %c0_i32 = arith.constant 0 : i32
    %c0_i32_0 = arith.constant 0 : i32
    %c0_i32_1 = arith.constant 0 : i32
    return %c0_i32, %c0_i32_0 : i32, i32
  }
  func.func @transform_7(%arg0: i32) -> (i32, i32) {
    %c0_i32 = arith.constant 0 : i32
    %c0_i32_0 = arith.constant 0 : i32
    %c0_i32_1 = arith.constant 0 : i32
    return %c0_i32, %c0_i32_0 : i32, i32
  }
  func.func @transform_8(%arg0: i32) -> (i32, i32) {
    %c0_i32 = arith.constant 0 : i32
    %c0_i32_0 = arith.constant 0 : i32
    return %c0_i32, %arg0 : i32, i32
  }
}

module attributes {stable_mosaic.version = 11 : i64} {
  func.func @_critic_kernel(%arg0: i32, %arg1: memref<128x38xf32, #tpu.memory_space<vmem>>, %arg2: memref<38x128xf32, #tpu.memory_space<vmem>>, %arg3: memref<8x256xf32, #tpu.memory_space<vmem>>, %arg4: memref<128x128xf32, #tpu.memory_space<vmem>>, %arg5: memref<128x128xf32, #tpu.memory_space<vmem>>, %arg6: memref<128x256xf32, #tpu.memory_space<vmem>>, %arg7: memref<8x256xf32, #tpu.memory_space<vmem>>, %arg8: memref<8x1xf32, #tpu.memory_space<vmem>>, %arg9: memref<8x128xf32, #tpu.memory_space<vmem>>) attributes {dimension_semantics = [#tpu.dimension_semantics<parallel>], iteration_bounds = array<i64: 1>, scalar_prefetch = 0 : i64, scratch_operands = 0 : i64, tpu.core_type = #tpu.core_type<tc>, window_params = [{transform_indices = @transform_0, window_bounds = array<i64: 128, 38>}, {pipeline_mode = #tpu.pipeline_mode<synchronous>, transform_indices = @transform_1, window_bounds = array<i64: 38, 128>}, {pipeline_mode = #tpu.pipeline_mode<synchronous>, transform_indices = @transform_2, window_bounds = array<i64: 8, 256>}, {pipeline_mode = #tpu.pipeline_mode<synchronous>, transform_indices = @transform_3, window_bounds = array<i64: 128, 128>}, {pipeline_mode = #tpu.pipeline_mode<synchronous>, transform_indices = @transform_4, window_bounds = array<i64: 128, 128>}, {pipeline_mode = #tpu.pipeline_mode<synchronous>, transform_indices = @transform_5, window_bounds = array<i64: 128, 256>}, {pipeline_mode = #tpu.pipeline_mode<synchronous>, transform_indices = @transform_6, window_bounds = array<i64: 8, 256>}, {pipeline_mode = #tpu.pipeline_mode<synchronous>, transform_indices = @transform_7, window_bounds = array<i64: 8, 1>}, {transform_indices = @transform_8, window_bounds = array<i64: 8, 128>}]} {
    %c0 = arith.constant 0 : index
    %c0_0 = arith.constant 0 : index
    %0 = vector.load %arg3[%c0, %c0_0] : memref<8x256xf32, #tpu.memory_space<vmem>>, vector<8x256xf32>
    %1 = vector.extract_strided_slice %0 {offsets = [0, 0], sizes = [1, 128], strides = [1, 1]} : vector<8x256xf32> to vector<1x128xf32>
    %2 = vector.extract_strided_slice %0 {offsets = [1, 0], sizes = [1, 128], strides = [1, 1]} : vector<8x256xf32> to vector<1x128xf32>
    %3 = vector.extract_strided_slice %0 {offsets = [2, 0], sizes = [1, 128], strides = [1, 1]} : vector<8x256xf32> to vector<1x128xf32>
    %4 = vector.extract_strided_slice %0 {offsets = [3, 0], sizes = [1, 128], strides = [1, 1]} : vector<8x256xf32> to vector<1x128xf32>
    %5 = vector.extract_strided_slice %0 {offsets = [4, 0], sizes = [1, 128], strides = [1, 1]} : vector<8x256xf32> to vector<1x128xf32>
    %6 = vector.extract_strided_slice %0 {offsets = [5, 0], sizes = [1, 256], strides = [1, 1]} : vector<8x256xf32> to vector<1x256xf32>
    %c0_1 = arith.constant 0 : index
    %c0_2 = arith.constant 0 : index
    %7 = vector.load %arg1[%c0_1, %c0_2] : memref<128x38xf32, #tpu.memory_space<vmem>>, vector<128x38xf32>
    %c0_3 = arith.constant 0 : index
    %c0_4 = arith.constant 0 : index
    %8 = vector.load %arg2[%c0_3, %c0_4] : memref<38x128xf32, #tpu.memory_space<vmem>>, vector<38x128xf32>
    %cst = arith.constant dense<0.000000e+00> : vector<128x128xf32>
    %9 = tpu.matmul %7, %8, %cst {dimension_numbers = #tpu.dot_dimension_numbers<[1], [0], [0], [1], [0, 0, 1, 1], [], []>} : vector<128x38xf32>, vector<38x128xf32>, vector<128x128xf32> -> vector<128x128xf32>
    %10 = vector.broadcast %1 : vector<1x128xf32> to vector<128x128xf32>
    %11 = arith.addf %9, %10 : vector<128x128xf32>
    %cst_5 = arith.constant dense<0.000000e+00> : vector<128xf32>
    %12 = vector.multi_reduction <add>, %11, %cst_5 [1] : vector<128x128xf32> to vector<128xf32>
    %13 = vector.shape_cast %12 : vector<128xf32> to vector<128x1xf32>
    %cst_6 = arith.constant 3.125000e-02 : f32
    %14 = vector.broadcast %cst_6 : f32 to vector<128x1xf32>
    %15 = arith.mulf %13, %14 : vector<128x1xf32>
    %16 = vector.broadcast %15 : vector<128x1xf32> to vector<128x128xf32>
    %17 = arith.subf %11, %16 : vector<128x128xf32>
    %18 = tpu.iota {dimensions = array<i32: 1>} : vector<1x128xi32>
    %c32_i32 = arith.constant 32 : i32
    %19 = vector.broadcast %c32_i32 : i32 to vector<1x128xi32>
    %20 = arith.cmpi slt, %18, %19 : vector<1x128xi32>
    %cst_7 = arith.constant 0.000000e+00 : f32
    %21 = vector.shape_cast %20 : vector<1x128xi1> to vector<1x128xi1>
    %22 = vector.broadcast %21 : vector<1x128xi1> to vector<128x128xi1>
    %23 = vector.broadcast %cst_7 : f32 to vector<128x128xf32>
    %24 = arith.select %22, %17, %23 : vector<128x128xi1>, vector<128x128xf32>
    %25 = arith.mulf %24, %24 : vector<128x128xf32>
    %cst_8 = arith.constant dense<0.000000e+00> : vector<128xf32>
    %26 = vector.multi_reduction <add>, %25, %cst_8 [1] : vector<128x128xf32> to vector<128xf32>
    %27 = vector.shape_cast %26 : vector<128xf32> to vector<128x1xf32>
    %cst_9 = arith.constant 3.125000e-02 : f32
    %28 = vector.broadcast %cst_9 : f32 to vector<128x1xf32>
    %29 = arith.mulf %27, %28 : vector<128x1xf32>
    %cst_10 = arith.constant 9.99999974E-6 : f32
    %30 = vector.broadcast %cst_10 : f32 to vector<128x1xf32>
    %31 = arith.addf %29, %30 : vector<128x1xf32>
    %32 = math.rsqrt %31 : vector<128x1xf32>
    %33 = vector.broadcast %32 : vector<128x1xf32> to vector<128x128xf32>
    %34 = arith.mulf %24, %33 : vector<128x128xf32>
    %35 = vector.broadcast %2 : vector<1x128xf32> to vector<128x128xf32>
    %36 = arith.mulf %34, %35 : vector<128x128xf32>
    %37 = vector.broadcast %3 : vector<1x128xf32> to vector<128x128xf32>
    %38 = arith.addf %36, %37 : vector<128x128xf32>
    %39 = math.tanh %38 : vector<128x128xf32>
    %c0_11 = arith.constant 0 : index
    %c0_12 = arith.constant 0 : index
    %40 = vector.load %arg4[%c0_11, %c0_12] : memref<128x128xf32, #tpu.memory_space<vmem>>, vector<128x128xf32>
    %cst_13 = arith.constant dense<0.000000e+00> : vector<128x128xf32>
    %41 = tpu.matmul %39, %40, %cst_13 {dimension_numbers = #tpu.dot_dimension_numbers<[1], [0], [0], [1], [0, 0, 1, 1], [], []>} : vector<128x128xf32>, vector<128x128xf32>, vector<128x128xf32> -> vector<128x128xf32>
    %42 = vector.broadcast %4 : vector<1x128xf32> to vector<128x128xf32>
    %43 = arith.addf %41, %42 : vector<128x128xf32>
    %cst_14 = arith.constant 0.000000e+00 : f32
    %44 = vector.broadcast %cst_14 : f32 to vector<128x128xf32>
    %45 = arith.maximumf %43, %44 : vector<128x128xf32>
    %c0_15 = arith.constant 0 : index
    %c0_16 = arith.constant 0 : index
    %46 = vector.load %arg5[%c0_15, %c0_16] : memref<128x128xf32, #tpu.memory_space<vmem>>, vector<128x128xf32>
    %cst_17 = arith.constant dense<0.000000e+00> : vector<128x128xf32>
    %47 = tpu.matmul %45, %46, %cst_17 {dimension_numbers = #tpu.dot_dimension_numbers<[1], [0], [0], [1], [0, 0, 1, 1], [], []>} : vector<128x128xf32>, vector<128x128xf32>, vector<128x128xf32> -> vector<128x128xf32>
    %48 = vector.broadcast %5 : vector<1x128xf32> to vector<128x128xf32>
    %49 = arith.addf %47, %48 : vector<128x128xf32>
    %cst_18 = arith.constant 0.000000e+00 : f32
    %50 = vector.broadcast %cst_18 : f32 to vector<128x128xf32>
    %51 = arith.maximumf %49, %50 : vector<128x128xf32>
    %c0_19 = arith.constant 0 : index
    %c0_20 = arith.constant 0 : index
    %52 = vector.load %arg6[%c0_19, %c0_20] : memref<128x256xf32, #tpu.memory_space<vmem>>, vector<128x256xf32>
    %cst_21 = arith.constant dense<0.000000e+00> : vector<128x256xf32>
    %53 = tpu.matmul %51, %52, %cst_21 {dimension_numbers = #tpu.dot_dimension_numbers<[1], [0], [0], [1], [0, 0, 1, 1], [], []>} : vector<128x128xf32>, vector<128x256xf32>, vector<128x256xf32> -> vector<128x256xf32>
    %54 = vector.broadcast %6 : vector<1x256xf32> to vector<128x256xf32>
    %55 = arith.addf %53, %54 : vector<128x256xf32>
    %cst_22 = arith.constant 0.000000e+00 : f32
    %56 = vector.broadcast %cst_22 : f32 to vector<128x256xf32>
    %57 = arith.maximumf %55, %56 : vector<128x256xf32>
    %c0_23 = arith.constant 0 : index
    %c0_24 = arith.constant 0 : index
    %58 = vector.load %arg7[%c0_23, %c0_24] : memref<8x256xf32, #tpu.memory_space<vmem>>, vector<8x256xf32>
    %cst_25 = arith.constant dense<0.000000e+00> : vector<8x128xf32>
    %59 = tpu.matmul %58, %57, %cst_25 {dimension_numbers = #tpu.dot_dimension_numbers<[1], [1], [0], [0], [0, 0, 1, 0], [], []>} : vector<8x256xf32>, vector<128x256xf32>, vector<8x128xf32> -> vector<8x128xf32>
    %c0_26 = arith.constant 0 : index
    %c0_27 = arith.constant 0 : index
    %60 = vector.load %arg8[%c0_26, %c0_27] : memref<8x1xf32, #tpu.memory_space<vmem>>, vector<8x1xf32>
    %61 = vector.broadcast %60 : vector<8x1xf32> to vector<8x128xf32>
    %62 = arith.addf %59, %61 : vector<8x128xf32>
    %c0_28 = arith.constant 0 : index
    %c0_29 = arith.constant 0 : index
    %63 = vector.load %arg9[%c0_28, %c0_29] : memref<8x128xf32, #tpu.memory_space<vmem>>, vector<8x128xf32>
    tpu.vector_store %arg9[%c0_28, %c0_29], %62 {strides = array<i32>} : memref<8x128xf32, #tpu.memory_space<vmem>>, vector<8x128xf32>,
    return
  }
  func.func @transform_0(%arg0: i32) -> (i32, i32) {
    %c0_i32 = arith.constant 0 : i32
    %c0_i32_0 = arith.constant 0 : i32
    return %arg0, %c0_i32 : i32, i32
  }
  func.func @transform_1(%arg0: i32) -> (i32, i32) {
    %c0_i32 = arith.constant 0 : i32
    %c0_i32_0 = arith.constant 0 : i32
    %c0_i32_1 = arith.constant 0 : i32
    return %c0_i32, %c0_i32_0 : i32, i32
  }
  func.func @transform_2(%arg0: i32) -> (i32, i32) {
    %c0_i32 = arith.constant 0 : i32
    %c0_i32_0 = arith.constant 0 : i32
    %c0_i32_1 = arith.constant 0 : i32
    return %c0_i32, %c0_i32_0 : i32, i32
  }
  func.func @transform_3(%arg0: i32) -> (i32, i32) {
    %c0_i32 = arith.constant 0 : i32
    %c0_i32_0 = arith.constant 0 : i32
    %c0_i32_1 = arith.constant 0 : i32
    return %c0_i32, %c0_i32_0 : i32, i32
  }
  func.func @transform_4(%arg0: i32) -> (i32, i32) {
    %c0_i32 = arith.constant 0 : i32
    %c0_i32_0 = arith.constant 0 : i32
    %c0_i32_1 = arith.constant 0 : i32
    return %c0_i32, %c0_i32_0 : i32, i32
  }
  func.func @transform_5(%arg0: i32) -> (i32, i32) {
    %c0_i32 = arith.constant 0 : i32
    %c0_i32_0 = arith.constant 0 : i32
    %c0_i32_1 = arith.constant 0 : i32
    return %c0_i32, %c0_i32_0 : i32, i32
  }
  func.func @transform_6(%arg0: i32) -> (i32, i32) {
    %c0_i32 = arith.constant 0 : i32
    %c0_i32_0 = arith.constant 0 : i32
    %c0_i32_1 = arith.constant 0 : i32
    return %c0_i32, %c0_i32_0 : i32, i32
  }
  func.func @transform_7(%arg0: i32) -> (i32, i32) {
    %c0_i32 = arith.constant 0 : i32
    %c0_i32_0 = arith.constant 0 : i32
    %c0_i32_1 = arith.constant 0 : i32
    return %c0_i32, %c0_i32_0 : i32, i32
  }
  func.func @transform_8(%arg0: i32) -> (i32, i32) {
    %c0_i32 = arith.constant 0 : i32
    %c0_i32_0 = arith.constant 0 : i32
    return %c0_i32, %arg0 : i32, i32
  }
}

</mosaic_0001>

<llo_original>
// kernel: tpu_custom_call.1
$region0: #{tpu_custom_call.1}
  #allocation0 [shape = 'u32[]', space=smem, size = 0x4, offset = 0x4, fixed_abs, tag = 'smem constant byte address 0x4 - core index']
  #allocation1 [shape = 'u32[144,128]{1,0:T(1,128)}', space=vmem, size = 0x12000, scoped, tag = 'internal scratch']
  %s0 = inlined_call_operand.vmem [shape: f32[128,38], index: 0, kind: input, shape index: {}]
  %s1 = inlined_call_operand.vmem [shape: f32[38,128], index: 1, kind: input, shape index: {}]
  %s2 = inlined_call_operand.vmem [shape: f32[8,256], index: 2, kind: input, shape index: {}]
  %s3 = inlined_call_operand.vmem [shape: f32[128,128], index: 3, kind: input, shape index: {}]
  %s4 = inlined_call_operand.hbm [shape: f32[128,128], index: 4, kind: input, shape index: {}]
  %s5 = inlined_call_operand.hbm [shape: f32[128,256], index: 5, kind: input, shape index: {}]
  %s6 = inlined_call_operand.hbm [shape: f32[8,256], index: 6, kind: input, shape index: {}]
  %s7 = inlined_call_operand.vmem [shape: f32[8,1], index: 7, kind: input, shape index: {}]
  %s8 = inlined_call_operand.hbm [shape: f32[8,128], index: 8, kind: output, shape index: {}]
  %s9 = sld [smem:[#allocation0]]
  $region54: #{tpu_custom_call.1} parent=0
    _
  %s11 = ssub.s32 1, %s9
  %s12 = scalar_select 0, %s11, %s9
  $region1: #{tpu_custom_call.1} parent=0
    #allocation2 [shape = 'u8[65536]{0}', space=vmem, size = 0x10000, scoped, tag = 'input window, operand 4, single buffered']
    #allocation3 [shape = 's32[1]{0}', space=sflag, size = 0x4, scoped, tag = 'scoped memory for tpu_custom_call.1']
    #allocation4 [shape = 's32[1]{0}', space=sflag, size = 0x4, scoped, tag = 'scoped memory for tpu_custom_call.1']
    #allocation5 [shape = 'u8[131072]{0}', space=vmem, size = 0x20000, scoped, tag = 'input window, operand 5, single buffered']
    #allocation6 [shape = 's32[1]{0}', space=sflag, size = 0x4, scoped, tag = 'scoped memory for tpu_custom_call.1']
    #allocation7 [shape = 'u8[8192]{0}', space=vmem, size = 0x2000, scoped, tag = 'input window, operand 6, single buffered']
    #allocation8 [shape = 'u8[4096]{0}', space=vmem, size = 0x1000, scoped, tag = 'output window, operand 0, single buffered']
    %13 = vsyncpa [#allocation3], 0
    %14 = vsyncpa [#allocation6], 0
    %15 = vsyncpa [#allocation4], 0
    // Predicated region
    $region2: #{tpu_custom_call.1} parent=1 // pred_check
      _
    $region3: #{tpu_custom_call.1} parent=1 // pred_check_branch
      %17 = sbr.rel (0) target = $region5
    $region4: #{tpu_custom_call.1} parent=1 // pred_region
      _
    $region5: #{tpu_custom_call.1} parent=1 // pred_fallthru
      _
    // Predicated region
    $region6: #{tpu_custom_call.1} parent=1 // pred_check
      _
    $region7: #{tpu_custom_call.1} parent=1 // pred_check_branch
      %19 = sbr.rel (0) target = $region9
    $region8: #{tpu_custom_call.1} parent=1 // pred_region
      _
    $region9: #{tpu_custom_call.1} parent=1 // pred_fallthru
      _
    // Predicated region
    $region10: #{tpu_custom_call.1} parent=1 // pred_check
      _
    $region11: #{tpu_custom_call.1} parent=1 // pred_check_branch
      %21 = sbr.rel (0) target = $region13
    $region12: #{tpu_custom_call.1} parent=1 // pred_region
      _
    $region13: #{tpu_custom_call.1} parent=1 // pred_fallthru
      _
    // Predicated region
    $region14: #{tpu_custom_call.1} parent=1 // pred_check
      _
    $region15: #{tpu_custom_call.1} parent=1 // pred_check_branch
      %23 = sbr.rel (0) target = $region17
    $region16: #{tpu_custom_call.1} parent=1 // pred_region
      _
    $region17: #{tpu_custom_call.1} parent=1 // pred_fallthru
      _
    // Predicated region
    $region18: #{tpu_custom_call.1} parent=1 // pred_check
      _
    $region19: #{tpu_custom_call.1} parent=1 // pred_check_branch
      %25 = sbr.rel (0) target = $region21
    $region20: #{tpu_custom_call.1} parent=1 // pred_region
      %s27 = ssub.s32 2048, 2048
      %28 = vsyncadd [#allocation3], %s27
      %s29 = sshll.u32 [#allocation2], 4
      %s30 = int_to_ptr.vmem [resolvable:$true] %s29
      %35 = dma.hbm_to_vmem [thread:$0]  %s4, 2048, %s30, [#allocation3], 128, 128, 8
    $region21: #{tpu_custom_call.1} parent=1 // pred_fallthru
      _
    // Predicated region
    $region22: #{tpu_custom_call.1} parent=1 // pred_check
      _
    $region23: #{tpu_custom_call.1} parent=1 // pred_check_branch
      %37 = sbr.rel (0) target = $region25
    $region24: #{tpu_custom_call.1} parent=1 // pred_region
      %s39 = ssub.s32 4096, 4096
      %40 = vsyncadd [#allocation6], %s39
      %s41 = sshll.u32 [#allocation5], 4
      %s42 = int_to_ptr.vmem [resolvable:$true] %s41
      %47 = dma.hbm_to_vmem [thread:$0]  %s5, 4096, %s42, [#allocation6], 256, 256, 16
    $region25: #{tpu_custom_call.1} parent=1 // pred_fallthru
      _
    // Predicated region
    $region26: #{tpu_custom_call.1} parent=1 // pred_check
      _
    $region27: #{tpu_custom_call.1} parent=1 // pred_check_branch
      %49 = sbr.rel (0) target = $region29
    $region28: #{tpu_custom_call.1} parent=1 // pred_region
      %s51 = ssub.s32 256, 256
      %52 = vsyncadd [#allocation6], %s51
      %s54 = sshll.u32 [#allocation7], 4
      %s55 = int_to_ptr.vmem [resolvable:$true] %s54
      %57 = dma.hbm_to_vmem [thread:$0]  %s6, 256, %s55, [#allocation6]
    $region29: #{tpu_custom_call.1} parent=1 // pred_fallthru
      _
    // Predicated region
    $region30: #{tpu_custom_call.1} parent=1 // pred_check
      _
    $region31: #{tpu_custom_call.1} parent=1 // pred_check_branch
      %59 = sbr.rel (0) target = $region33
    $region32: #{tpu_custom_call.1} parent=1 // pred_region
      _
    $region33: #{tpu_custom_call.1} parent=1 // pred_fallthru
      _
    // Predicated region
    $region34: #{tpu_custom_call.1} parent=1 // pred_check
      _
    $region35: #{tpu_custom_call.1} parent=1 // pred_check_branch
      %61 = sbr.rel (0) target = $region37
    $region36: #{tpu_custom_call.1} parent=1 // pred_region
      %62 = dma.done [#allocation3], 2048
    $region37: #{tpu_custom_call.1} parent=1 // pred_fallthru
      _
    // Predicated region
    $region38: #{tpu_custom_call.1} parent=1 // pred_check
      _
    $region39: #{tpu_custom_call.1} parent=1 // pred_check_branch
      %64 = sbr.rel (0) target = $region41
    $region40: #{tpu_custom_call.1} parent=1 // pred_region
      %65 = dma.done [#allocation6], 4096
    $region41: #{tpu_custom_call.1} parent=1 // pred_fallthru
      _
    // Predicated region
    $region42: #{tpu_custom_call.1} parent=1 // pred_check
      _
    $region43: #{tpu_custom_call.1} parent=1 // pred_check_branch
      %67 = sbr.rel (0) target = $region45
    $region44: #{tpu_custom_call.1} parent=1 // pred_region
      %68 = dma.done [#allocation6], 256
    $region45: #{tpu_custom_call.1} parent=1 // pred_fallthru
      _
    %v69 = vld [vmem:[%s2] sm:$0xff]
    %v70 = vld [vmem:[%s2 + $0x8] sm:$0xff]
    %v71 = vld [vmem:[%s0] sm:$0xff]
    %v72 = vld [vmem:[%s0 + $0x8] sm:$0xff]
    %v73 = vld [vmem:[%s0 + $0x10] sm:$0xff]
    %v74 = vld [vmem:[%s0 + $0x18] sm:$0xff]
    %v75 = vld [vmem:[%s0 + $0x20] sm:$0xff]
    %v76 = vld [vmem:[%s0 + $0x28] sm:$0xff]
    %v77 = vld [vmem:[%s0 + $0x30] sm:$0xff]
    %v78 = vld [vmem:[%s0 + $0x38] sm:$0xff]
    %v79 = vld [vmem:[%s0 + $0x40] sm:$0xff]
    %v80 = vld [vmem:[%s0 + $0x48] sm:$0xff]
    %v81 = vld [vmem:[%s0 + $0x50] sm:$0xff]
    %v82 = vld [vmem:[%s0 + $0x58] sm:$0xff]
    %v83 = vld [vmem:[%s0 + $0x60] sm:$0xff]
    %v84 = vld [vmem:[%s0 + $0x68] sm:$0xff]
    %v85 = vld [vmem:[%s0 + $0x70] sm:$0xff]
    %v86 = vld [vmem:[%s0 + $0x78] sm:$0xff]
    %v87 = vld [vmem:[%s1] sm:$0xff]
    %v88 = vld [vmem:[%s1 + $0x8] sm:$0xff]
    %v89 = vld [vmem:[%s1 + $0x10] sm:$0xff]
    %v90 = vld [vmem:[%s1 + $0x18] sm:$0xff]
    %v91 = vld [vmem:[%s1 + $0x20] sm:$0x3f]
    %v92 = vlaneseq
    %v93 = vshrl.u32 %v92, 7
    %v94 = vsub.s32 0, %v93
    %v95 = vrot.slane %v69, %v94
    %vm96 = vcmask 310272
    %v98 = vsel %vm96, %v71, 0
    %v101 = vsel %vm96, %v72, 0
    %v104 = vsel %vm96, %v73, 0
    %v107 = vsel %vm96, %v74, 0
    %v110 = vsel %vm96, %v75, 0
    %v113 = vsel %vm96, %v76, 0
    %v116 = vsel %vm96, %v77, 0
    %v119 = vsel %vm96, %v78, 0
    %v122 = vsel %vm96, %v79, 0
    %v125 = vsel %vm96, %v80, 0
    %v128 = vsel %vm96, %v81, 0
    %v131 = vsel %vm96, %v82, 0
    %v134 = vsel %vm96, %v83, 0
    %v137 = vsel %vm96, %v84, 0
    %v140 = vsel %vm96, %v85, 0
    %v143 = vsel %vm96, %v86, 0
    %vm145 = vcmask 1045504
    %v147 = vsel %vm145, %v91, 0
    %149 = vmatprep.subr.mxu0 0.0
    %150 = vmatpush1.msra.mxu0 %v87
    %151 = vmatprep.subr.mxu0 0.0
    %152 = vmatpush1.msra.mxu0 %v88
    %153 = vmatprep.subr.mxu0 0.0
    %154 = vmatpush1.msra.mxu0 %v89
    %155 = vmatprep.subr.mxu0 0.0
    %156 = vmatpush1.msra.mxu0 %v90
    %157 = vmatprep.subr.mxu0 0.0
    %158 = vmatpush1.msra.mxu0 %v147
    %159 = vmatprep.subr.mxu0 0.0
    %160 = vmatpush1.msra.mxu0 0.0
    %161 = vmatprep.subr.mxu0 0.0
    %162 = vmatpush1.msra.mxu0 0.0
    %163 = vmatprep.subr.mxu0 0.0
    %164 = vmatpush1.msra.mxu0 0.0
    %165 = vmatprep.subr.mxu0 0.0
    %166 = vmatpush1.msra.mxu0 0.0
    %167 = vmatprep.subr.mxu0 0.0
    %168 = vmatpush1.msra.mxu0 0.0
    %169 = vmatprep.subr.mxu0 0.0
    %170 = vmatpush1.msra.mxu0 0.0
    %171 = vmatprep.subr.mxu0 0.0
    %172 = vmatpush1.msra.mxu0 0.0
    %173 = vmatprep.subr.mxu0 0.0
    %174 = vmatpush1.msra.mxu0 0.0
    %175 = vmatprep.subr.mxu0 0.0
    %176 = vmatpush1.msra.mxu0 0.0
    %177 = vmatprep.subr.mxu0 0.0
    %178 = vmatpush1.msra.mxu0 0.0
    %179 = vmatprep.subr.mxu0 0.0
    %180 = vmatpush1.msra.mxu0 0.0
    %181 = vmatprep.subr.mxu0 0.0
    %182 = vmatpush1.msra.mxu0 0.0
    %183 = vmatprep.subr.mxu0 0.0
    %184 = vmatpush1.msra.mxu0 0.0
    %185 = vmatprep.subr.mxu0 0.0
    %186 = vmatpush1.msra.mxu0 0.0
    %187 = vmatprep.subr.mxu0 0.0
    %188 = vmatpush1.msra.mxu0 0.0
    %189 = vmatprep.subr.mxu0 0.0
    %190 = vmatpush1.msra.mxu0 0.0
    %191 = vmatprep.subr.mxu0 0.0
    %192 = vmatpush1.msra.mxu0 0.0
    %193 = vmatprep.subr.mxu0 0.0
    %194 = vmatpush1.msra.mxu0 0.0
    %195 = vmatprep.subr.mxu0 0.0
    %196 = vmatpush1.msra.mxu0 0.0
    %197 = vmatprep.subr.mxu0 0.0
    %198 = vmatpush1.msra.mxu0 0.0
    %199 = vmatprep.subr.mxu0 0.0
    %200 = vmatpush1.msra.mxu0 0.0
    %201 = vmatprep.subr.mxu0 0.0
    %202 = vmatpush1.msra.mxu0 0.0
    %203 = vmatprep.subr.mxu0 0.0
    %204 = vmatpush1.msra.mxu0 0.0
    %205 = vmatprep.subr.mxu0 0.0
    %206 = vmatpush1.msra.mxu0 0.0
    %207 = vmatprep.subr.mxu0 0.0
    %208 = vmatpush1.msra.mxu0 0.0
    %209 = vmatprep.subr.mxu0 0.0
    %210 = vmatpush1.msra.mxu0 0.0
    %211 = vmatprep.subr.mxu0 0.0
    %212 = vmatpush1.msra.mxu0 0.0
    %213 = vmatprep.mubr.f32.mxu0 0.0
    %214 = vmatmul.mubr.f32.gmra.mrb[0].mxu0 %v98
    %v215 = vpop.f32.mrb[0].mxu0
    %v216 = vadd.f32 %v95, %v215
    %v217 = vpop.f32.mrb[0].mxu0
    %218 = vmatprep.mubr.f32.mxu0 0.0
    %219 = vmatmul.mubr.f32.gmra.mrb[0].mxu0 %v101
    %v220 = vpop.f32.mrb[0].mxu0
    %v221 = vadd.f32 %v95, %v220
    %v222 = vpop.f32.mrb[0].mxu0
    %223 = vmatprep.mubr.f32.mxu0 0.0
    %224 = vmatmul.mubr.f32.gmra.mrb[0].mxu0 %v104
    %v225 = vpop.f32.mrb[0].mxu0
    %v226 = vadd.f32 %v95, %v225
    %v227 = vpop.f32.mrb[0].mxu0
    %228 = vmatprep.mubr.f32.mxu0 0.0
    %229 = vmatmul.mubr.f32.gmra.mrb[0].mxu0 %v107
    %v230 = vpop.f32.mrb[0].mxu0
    %v231 = vadd.f32 %v95, %v230
    %v232 = vpop.f32.mrb[0].mxu0
    %233 = vmatprep.mubr.f32.mxu0 0.0
    %234 = vmatmul.mubr.f32.gmra.mrb[0].mxu0 %v110
    %v235 = vpop.f32.mrb[0].mxu0
    %v236 = vadd.f32 %v95, %v235
    %v237 = vpop.f32.mrb[0].mxu0
    %238 = vmatprep.mubr.f32.mxu0 0.0
    %239 = vmatmul.mubr.f32.gmra.mrb[0].mxu0 %v113
    %v240 = vpop.f32.mrb[0].mxu0
    %v241 = vadd.f32 %v95, %v240
    %v242 = vpop.f32.mrb[0].mxu0
    %243 = vmatprep.mubr.f32.mxu0 0.0
    %244 = vmatmul.mubr.f32.gmra.mrb[0].mxu0 %v116
    %v245 = vpop.f32.mrb[0].mxu0
    %v246 = vadd.f32 %v95, %v245
    %v247 = vpop.f32.mrb[0].mxu0
    %248 = vmatprep.mubr.f32.mxu0 0.0
    %249 = vmatmul.mubr.f32.gmra.mrb[0].mxu0 %v119
    %v250 = vpop.f32.mrb[0].mxu0
    %v251 = vadd.f32 %v95, %v250
    %v252 = vpop.f32.mrb[0].mxu0
    %253 = vmatprep.mubr.f32.mxu0 0.0
    %254 = vmatmul.mubr.f32.gmra.mrb[0].mxu0 %v122
    %v255 = vpop.f32.mrb[0].mxu0
    %v256 = vadd.f32 %v95, %v255
    %v257 = vpop.f32.mrb[0].mxu0
    %258 = vmatprep.mubr.f32.mxu0 0.0
    %259 = vmatmul.mubr.f32.gmra.mrb[0].mxu0 %v125
    %v260 = vpop.f32.mrb[0].mxu0
    %v261 = vadd.f32 %v95, %v260
    %v262 = vpop.f32.mrb[0].mxu0
    %263 = vmatprep.mubr.f32.mxu0 0.0
    %264 = vmatmul.mubr.f32.gmra.mrb[0].mxu0 %v128
    %v265 = vpop.f32.mrb[0].mxu0
    %v266 = vadd.f32 %v95, %v265
    %v267 = vpop.f32.mrb[0].mxu0
    %268 = vmatprep.mubr.f32.mxu0 0.0
    %269 = vmatmul.mubr.f32.gmra.mrb[0].mxu0 %v131
    %v270 = vpop.f32.mrb[0].mxu0
    %v271 = vadd.f32 %v95, %v270
    %v272 = vpop.f32.mrb[0].mxu0
    %273 = vmatprep.mubr.f32.mxu0 0.0
    %274 = vmatmul.mubr.f32.gmra.mrb[0].mxu0 %v134
    %v275 = vpop.f32.mrb[0].mxu0
    %v276 = vadd.f32 %v95, %v275
    %v277 = vpop.f32.mrb[0].mxu0
    %278 = vmatprep.mubr.f32.mxu0 0.0
    %279 = vmatmul.mubr.f32.gmra.mrb[0].mxu0 %v137
    %v280 = vpop.f32.mrb[0].mxu0
    %v281 = vadd.f32 %v95, %v280
    %v282 = vpop.f32.mrb[0].mxu0
    %283 = vmatprep.mubr.f32.mxu0 0.0
    %284 = vmatmul.mubr.f32.gmra.mrb[0].mxu0 %v140
    %v285 = vpop.f32.mrb[0].mxu0
    %v286 = vadd.f32 %v95, %v285
    %v287 = vpop.f32.mrb[0].mxu0
    %288 = vmatprep.mubr.f32.mxu0 0.0
    %289 = vmatmul.mubr.f32.gmra.mrb[0].mxu0 %v143
    %v290 = vpop.f32.mrb[0].mxu0
    %v291 = vadd.f32 %v95, %v290
    %v292 = vpop.f32.mrb[0].mxu0
    %293 = vdwg.mxu0
    %294 = vadd.xlane.f32.xlu0 %v216
    %v295 = vpop.xlane.xlu0 %294
    %296 = vadd.xlane.f32.xlu0 %v221
    %v297 = vpop.xlane.xlu0 %296
    %298 = vadd.xlane.f32.xlu0 %v226
    %v299 = vpop.xlane.xlu0 %298
    %300 = vadd.xlane.f32.xlu0 %v231
    %v301 = vpop.xlane.xlu0 %300
    %302 = vadd.xlane.f32.xlu0 %v236
    %v303 = vpop.xlane.xlu0 %302
    %304 = vadd.xlane.f32.xlu0 %v241
    %v305 = vpop.xlane.xlu0 %304
    %306 = vadd.xlane.f32.xlu0 %v246
    %v307 = vpop.xlane.xlu0 %306
    %308 = vadd.xlane.f32.xlu0 %v251
    %v309 = vpop.xlane.xlu0 %308
    %310 = vadd.xlane.f32.xlu0 %v256
    %v311 = vpop.xlane.xlu0 %310
    %312 = vadd.xlane.f32.xlu0 %v261
    %v313 = vpop.xlane.xlu0 %312
    %314 = vadd.xlane.f32.xlu0 %v266
    %v315 = vpop.xlane.xlu0 %314
    %316 = vadd.xlane.f32.xlu0 %v271
    %v317 = vpop.xlane.xlu0 %316
    %318 = vadd.xlane.f32.xlu0 %v276
    %v319 = vpop.xlane.xlu0 %318
    %320 = vadd.xlane.f32.xlu0 %v281
    %v321 = vpop.xlane.xlu0 %320
    %322 = vadd.xlane.f32.xlu0 %v286
    %v323 = vpop.xlane.xlu0 %322
    %324 = vadd.xlane.f32.xlu0 %v291
    %v325 = vpop.xlane.xlu0 %324
    %v326 = vmul.f32 %v295, 0.03125
    %v327 = vmul.f32 %v297, 0.03125
    %v328 = vmul.f32 %v299, 0.03125
    %v329 = vmul.f32 %v301, 0.03125
    %v330 = vmul.f32 %v303, 0.03125
    %v331 = vmul.f32 %v305, 0.03125
    %v332 = vmul.f32 %v307, 0.03125
    %v333 = vmul.f32 %v309, 0.03125
    %v334 = vmul.f32 %v311, 0.03125
    %v335 = vmul.f32 %v313, 0.03125
    %v336 = vmul.f32 %v315, 0.03125
    %v337 = vmul.f32 %v317, 0.03125
    %v338 = vmul.f32 %v319, 0.03125
    %v339 = vmul.f32 %v321, 0.03125
    %v340 = vmul.f32 %v323, 0.03125
    %v341 = vmul.f32 %v325, 0.03125
    %v342 = vsub.f32 %v216, %v326
    %v343 = vsub.f32 %v221, %v327
    %v344 = vsub.f32 %v226, %v328
    %v345 = vsub.f32 %v231, %v329
    %v346 = vsub.f32 %v236, %v330
    %v347 = vsub.f32 %v241, %v331
    %v348 = vsub.f32 %v246, %v332
    %v349 = vsub.f32 %v251, %v333
    %v350 = vsub.f32 %v256, %v334
    %v351 = vsub.f32 %v261, %v335
    %v352 = vsub.f32 %v266, %v336
    %v353 = vsub.f32 %v271, %v337
    %v354 = vsub.f32 %v276, %v338
    %v355 = vsub.f32 %v281, %v339
    %v356 = vsub.f32 %v286, %v340
    %v357 = vsub.f32 %v291, %v341
    %v358 = vlaneseq
    %v359 = vand.u32 %v358, 127
    %vm360 = vcmp.lt.s32.totalorder %v359, 32
    %v361 = vsel %vm360, 1, 0
    %vm362 = vcmp.eq.s32.totalorder %v361, 1
    %v363 = vsel %vm362, %v342, 0.0
    %v364 = vsel %vm362, %v343, 0.0
    %v365 = vsel %vm362, %v344, 0.0
    %v366 = vsel %vm362, %v345, 0.0
    %v367 = vsel %vm362, %v346, 0.0
    %v368 = vsel %vm362, %v347, 0.0
    %v369 = vsel %vm362, %v348, 0.0
    %v370 = vsel %vm362, %v349, 0.0
    %v371 = vsel %vm362, %v350, 0.0
    %v372 = vsel %vm362, %v351, 0.0
    %v373 = vsel %vm362, %v352, 0.0
    %v374 = vsel %vm362, %v353, 0.0
    %v375 = vsel %vm362, %v354, 0.0
    %v376 = vsel %vm362, %v355, 0.0
    %v377 = vsel %vm362, %v356, 0.0
    %v378 = vsel %vm362, %v357, 0.0
    %v379 = vmul.f32 %v363, %v363
    %v380 = vmul.f32 %v364, %v364
    %v381 = vmul.f32 %v365, %v365
    %v382 = vmul.f32 %v366, %v366
    %v383 = vmul.f32 %v367, %v367
    %v384 = vmul.f32 %v368, %v368
    %v385 = vmul.f32 %v369, %v369
    %v386 = vmul.f32 %v370, %v370
    %v387 = vmul.f32 %v371, %v371
    %v388 = vmul.f32 %v372, %v372
    %v389 = vmul.f32 %v373, %v373
    %v390 = vmul.f32 %v374, %v374
    %v391 = vmul.f32 %v375, %v375
    %v392 = vmul.f32 %v376, %v376
    %v393 = vmul.f32 %v377, %v377
    %v394 = vmul.f32 %v378, %v378
    %395 = vadd.xlane.f32.xlu0 %v379
    %v396 = vpop.xlane.xlu0 %395
    %397 = vadd.xlane.f32.xlu0 %v380
    %v398 = vpop.xlane.xlu0 %397
    %399 = vadd.xlane.f32.xlu0 %v381
    %v400 = vpop.xlane.xlu0 %399
    %401 = vadd.xlane.f32.xlu0 %v382
    %v402 = vpop.xlane.xlu0 %401
    %403 = vadd.xlane.f32.xlu0 %v383
    %v404 = vpop.xlane.xlu0 %403
    %405 = vadd.xlane.f32.xlu0 %v384
    %v406 = vpop.xlane.xlu0 %405
    %407 = vadd.xlane.f32.xlu0 %v385
    %v408 = vpop.xlane.xlu0 %407
    %409 = vadd.xlane.f32.xlu0 %v386
    %v410 = vpop.xlane.xlu0 %409
    %411 = vadd.xlane.f32.xlu0 %v387
    %v412 = vpop.xlane.xlu0 %411
    %413 = vadd.xlane.f32.xlu0 %v388
    %v414 = vpop.xlane.xlu0 %413
    %415 = vadd.xlane.f32.xlu0 %v389
    %v416 = vpop.xlane.xlu0 %415
    %417 = vadd.xlane.f32.xlu0 %v390
    %v418 = vpop.xlane.xlu0 %417
    %419 = vadd.xlane.f32.xlu0 %v391
    %v420 = vpop.xlane.xlu0 %419
    %421 = vadd.xlane.f32.xlu0 %v392
    %v422 = vpop.xlane.xlu0 %421
    %423 = vadd.xlane.f32.xlu0 %v393
    %v424 = vpop.xlane.xlu0 %423
    %425 = vadd.xlane.f32.xlu0 %v394
    %v426 = vpop.xlane.xlu0 %425
    %v427 = vmul.f32 %v396, 0.03125
    %v428 = vmul.f32 %v398, 0.03125
    %v429 = vmul.f32 %v400, 0.03125
    %v430 = vmul.f32 %v402, 0.03125
    %v431 = vmul.f32 %v404, 0.03125
    %v432 = vmul.f32 %v406, 0.03125
    %v433 = vmul.f32 %v408, 0.03125
    %v434 = vmul.f32 %v410, 0.03125
    %v435 = vmul.f32 %v412, 0.03125
    %v436 = vmul.f32 %v414, 0.03125
    %v437 = vmul.f32 %v416, 0.03125
    %v438 = vmul.f32 %v418, 0.03125
    %v439 = vmul.f32 %v420, 0.03125
    %v440 = vmul.f32 %v422, 0.03125
    %v441 = vmul.f32 %v424, 0.03125
    %v442 = vmul.f32 %v426, 0.03125
    %v443 = vadd.f32 %v427, 1e-05
    %v444 = vadd.f32 %v428, 1e-05
    %v445 = vadd.f32 %v429, 1e-05
    %v446 = vadd.f32 %v430, 1e-05
    %v447 = vadd.f32 %v431, 1e-05
    %v448 = vadd.f32 %v432, 1e-05
    %v449 = vadd.f32 %v433, 1e-05
    %v450 = vadd.f32 %v434, 1e-05
    %v451 = vadd.f32 %v435, 1e-05
    %v452 = vadd.f32 %v436, 1e-05
    %v453 = vadd.f32 %v437, 1e-05
    %v454 = vadd.f32 %v438, 1e-05
    %v455 = vadd.f32 %v439, 1e-05
    %v456 = vadd.f32 %v440, 1e-05
    %v457 = vadd.f32 %v441, 1e-05
    %v458 = vadd.f32 %v442, 1e-05
    %v459 = vrsqrt.pop %v443
    %v460 = vrsqrt.pop %v444
    %v461 = vrsqrt.pop %v445
    %v462 = vrsqrt.pop %v446
    %v463 = vrsqrt.pop %v447
    %v464 = vrsqrt.pop %v448
    %v465 = vrsqrt.pop %v449
    %v466 = vrsqrt.pop %v450
    %v467 = vrsqrt.pop %v451
    %v468 = vrsqrt.pop %v452
    %v469 = vrsqrt.pop %v453
    %v470 = vrsqrt.pop %v454
    %v471 = vrsqrt.pop %v455
    %v472 = vrsqrt.pop %v456
    %v473 = vrsqrt.pop %v457
    %v474 = vrsqrt.pop %v458
    %v475 = vmul.f32 %v363, %v459
    %v476 = vmul.f32 %v364, %v460
    %v477 = vmul.f32 %v365, %v461
    %v478 = vmul.f32 %v366, %v462
    %v479 = vmul.f32 %v367, %v463
    %v480 = vmul.f32 %v368, %v464
    %v481 = vmul.f32 %v369, %v465
    %v482 = vmul.f32 %v370, %v466
    %v483 = vmul.f32 %v371, %v467
    %v484 = vmul.f32 %v372, %v468
    %v485 = vmul.f32 %v373, %v469
    %v486 = vmul.f32 %v374, %v470
    %v487 = vmul.f32 %v375, %v471
    %v488 = vmul.f32 %v376, %v472
    %v489 = vmul.f32 %v377, %v473
    %v490 = vmul.f32 %v378, %v474
    %v491 = vlaneseq
    %v492 = vshrl.u32 %v491, 7
    %v493 = vsub.s32 1, %v492
    %v494 = vrot.slane %v69, %v493
    %v495 = vmul.f32 %v475, %v494
    %v496 = vmul.f32 %v476, %v494
    %v497 = vmul.f32 %v477, %v494
    %v498 = vmul.f32 %v478, %v494
    %v499 = vmul.f32 %v479, %v494
    %v500 = vmul.f32 %v480, %v494
    %v501 = vmul.f32 %v481, %v494
    %v502 = vmul.f32 %v482, %v494
    %v503 = vmul.f32 %v483, %v494
    %v504 = vmul.f32 %v484, %v494
    %v505 = vmul.f32 %v485, %v494
    %v506 = vmul.f32 %v486, %v494
    %v507 = vmul.f32 %v487, %v494
    %v508 = vmul.f32 %v488, %v494
    %v509 = vmul.f32 %v489, %v494
    %v510 = vmul.f32 %v490, %v494
    %v511 = vlaneseq
    %v512 = vshrl.u32 %v511, 7
    %v513 = vsub.s32 2, %v512
    %v514 = vrot.slane %v69, %v513
    %v515 = vadd.f32 %v495, %v514
    %v516 = vadd.f32 %v496, %v514
    %v517 = vadd.f32 %v497, %v514
    %v518 = vadd.f32 %v498, %v514
    %v519 = vadd.f32 %v499, %v514
    %v520 = vadd.f32 %v500, %v514
    %v521 = vadd.f32 %v501, %v514
    %v522 = vadd.f32 %v502, %v514
    %v523 = vadd.f32 %v503, %v514
    %v524 = vadd.f32 %v504, %v514
    %v525 = vadd.f32 %v505, %v514
    %v526 = vadd.f32 %v506, %v514
    %v527 = vadd.f32 %v507, %v514
    %v528 = vadd.f32 %v508, %v514
    %v529 = vadd.f32 %v509, %v514
    %v530 = vadd.f32 %v510, %v514
    %v531 = vtanh.pop %v515
    %v532 = vtanh.pop %v516
    %v533 = vtanh.pop %v517
    %v534 = vtanh.pop %v518
    %v535 = vtanh.pop %v519
    %v536 = vtanh.pop %v520
    %v537 = vtanh.pop %v521
    %v538 = vtanh.pop %v522
    %v539 = vtanh.pop %v523
    %v540 = vtanh.pop %v524
    %v541 = vtanh.pop %v525
    %v542 = vtanh.pop %v526
    %v543 = vtanh.pop %v527
    %v544 = vtanh.pop %v528
    %v545 = vtanh.pop %v529
    %v546 = vtanh.pop %v530
    %v547 = vld [vmem:[%s3] sm:$0xff]
    %v548 = vld [vmem:[%s3 + $0x8] sm:$0xff]
    %v549 = vld [vmem:[%s3 + $0x10] sm:$0xff]
    %v550 = vld [vmem:[%s3 + $0x18] sm:$0xff]
    %v551 = vld [vmem:[%s3 + $0x20] sm:$0xff]
    %v552 = vld [vmem:[%s3 + $0x28] sm:$0xff]
    %v553 = vld [vmem:[%s3 + $0x30] sm:$0xff]
    %v554 = vld [vmem:[%s3 + $0x38] sm:$0xff]
    %v555 = vld [vmem:[%s3 + $0x40] sm:$0xff]
    %v556 = vld [vmem:[%s3 + $0x48] sm:$0xff]
    %v557 = vld [vmem:[%s3 + $0x50] sm:$0xff]
    %v558 = vld [vmem:[%s3 + $0x58] sm:$0xff]
    %v559 = vld [vmem:[%s3 + $0x60] sm:$0xff]
    %v560 = vld [vmem:[%s3 + $0x68] sm:$0xff]
    %v561 = vld [vmem:[%s3 + $0x70] sm:$0xff]
    %v562 = vld [vmem:[%s3 + $0x78] sm:$0xff]
    %v563 = vlaneseq
    %v564 = vshrl.u32 %v563, 7
    %v565 = vsub.s32 3, %v564
    %v566 = vrot.slane %v69, %v565
    %567 = vmatprep.subr.mxu0 0.0
    %568 = vmatpush1.msra.mxu0 %v547
    %569 = vmatprep.subr.mxu0 0.0
    %570 = vmatpush1.msra.mxu0 %v548
    %571 = vmatprep.subr.mxu0 0.0
    %572 = vmatpush1.msra.mxu0 %v549
    %573 = vmatprep.subr.mxu0 0.0
    %574 = vmatpush1.msra.mxu0 %v550
    %575 = vmatprep.subr.mxu0 0.0
    %576 = vmatpush1.msra.mxu0 %v551
    %577 = vmatprep.subr.mxu0 0.0
    %578 = vmatpush1.msra.mxu0 %v552
    %579 = vmatprep.subr.mxu0 0.0
    %580 = vmatpush1.msra.mxu0 %v553
    %581 = vmatprep.subr.mxu0 0.0
    %582 = vmatpush1.msra.mxu0 %v554
    %583 = vmatprep.subr.mxu0 0.0
    %584 = vmatpush1.msra.mxu0 %v555
    %585 = vmatprep.subr.mxu0 0.0
    %586 = vmatpush1.msra.mxu0 %v556
    %587 = vmatprep.subr.mxu0 0.0
    %588 = vmatpush1.msra.mxu0 %v557
    %589 = vmatprep.subr.mxu0 0.0
    %590 = vmatpush1.msra.mxu0 %v558
    %591 = vmatprep.subr.mxu0 0.0
    %592 = vmatpush1.msra.mxu0 %v559
    %593 = vmatprep.subr.mxu0 0.0
    %594 = vmatpush1.msra.mxu0 %v560
    %595 = vmatprep.subr.mxu0 0.0
    %596 = vmatpush1.msra.mxu0 %v561
    %597 = vmatprep.subr.mxu0 0.0
    %598 = vmatpush1.msra.mxu0 %v562
    %599 = vmatprep.subr.mxu0 0.0
    %600 = vmatpush1.msra.mxu0 0.0
    %601 = vmatprep.subr.mxu0 0.0
    %602 = vmatpush1.msra.mxu0 0.0
    %603 = vmatprep.subr.mxu0 0.0
    %604 = vmatpush1.msra.mxu0 0.0
    %605 = vmatprep.subr.mxu0 0.0
    %606 = vmatpush1.msra.mxu0 0.0
    %607 = vmatprep.subr.mxu0 0.0
    %608 = vmatpush1.msra.mxu0 0.0
    %609 = vmatprep.subr.mxu0 0.0
    %610 = vmatpush1.msra.mxu0 0.0
    %611 = vmatprep.subr.mxu0 0.0
    %612 = vmatpush1.msra.mxu0 0.0
    %613 = vmatprep.subr.mxu0 0.0
    %614 = vmatpush1.msra.mxu0 0.0
    %615 = vmatprep.subr.mxu0 0.0
    %616 = vmatpush1.msra.mxu0 0.0
    %617 = vmatprep.subr.mxu0 0.0
    %618 = vmatpush1.msra.mxu0 0.0
    %619 = vmatprep.subr.mxu0 0.0
    %620 = vmatpush1.msra.mxu0 0.0
    %621 = vmatprep.subr.mxu0 0.0
    %622 = vmatpush1.msra.mxu0 0.0
    %623 = vmatprep.subr.mxu0 0.0
    %624 = vmatpush1.msra.mxu0 0.0
    %625 = vmatprep.subr.mxu0 0.0
    %626 = vmatpush1.msra.mxu0 0.0
    %627 = vmatprep.subr.mxu0 0.0
    %628 = vmatpush1.msra.mxu0 0.0
    %629 = vmatprep.subr.mxu0 0.0
    %630 = vmatpush1.msra.mxu0 0.0
    %631 = vmatprep.mubr.f32.mxu0 0.0
    %632 = vmatmul.mubr.f32.gmra.mrb[0].mxu0 %v531
    %v633 = vpop.f32.mrb[0].mxu0
    %v634 = vadd.f32 %v566, %v633
    %v635 = vpop.f32.mrb[0].mxu0
    %636 = vmatprep.mubr.f32.mxu0 0.0
    %637 = vmatmul.mubr.f32.gmra.mrb[0].mxu0 %v532
    %v638 = vpop.f32.mrb[0].mxu0
    %v639 = vadd.f32 %v566, %v638
    %v640 = vpop.f32.mrb[0].mxu0
    %641 = vmatprep.mubr.f32.mxu0 0.0
    %642 = vmatmul.mubr.f32.gmra.mrb[0].mxu0 %v533
    %v643 = vpop.f32.mrb[0].mxu0
    %v644 = vadd.f32 %v566, %v643
    %v645 = vpop.f32.mrb[0].mxu0
    %646 = vmatprep.mubr.f32.mxu0 0.0
    %647 = vmatmul.mubr.f32.gmra.mrb[0].mxu0 %v534
    %v648 = vpop.f32.mrb[0].mxu0
    %v649 = vadd.f32 %v566, %v648
    %v650 = vpop.f32.mrb[0].mxu0
    %651 = vmatprep.mubr.f32.mxu0 0.0
    %652 = vmatmul.mubr.f32.gmra.mrb[0].mxu0 %v535
    %v653 = vpop.f32.mrb[0].mxu0
    %v654 = vadd.f32 %v566, %v653
    %v655 = vpop.f32.mrb[0].mxu0
    %656 = vmatprep.mubr.f32.mxu0 0.0
    %657 = vmatmul.mubr.f32.gmra.mrb[0].mxu0 %v536
    %v658 = vpop.f32.mrb[0].mxu0
    %v659 = vadd.f32 %v566, %v658
    %v660 = vpop.f32.mrb[0].mxu0
    %661 = vmatprep.mubr.f32.mxu0 0.0
    %662 = vmatmul.mubr.f32.gmra.mrb[0].mxu0 %v537
    %v663 = vpop.f32.mrb[0].mxu0
    %v664 = vadd.f32 %v566, %v663
    %v665 = vpop.f32.mrb[0].mxu0
    %666 = vmatprep.mubr.f32.mxu0 0.0
    %667 = vmatmul.mubr.f32.gmra.mrb[0].mxu0 %v538
    %v668 = vpop.f32.mrb[0].mxu0
    %v669 = vadd.f32 %v566, %v668
    %v670 = vpop.f32.mrb[0].mxu0
    %671 = vmatprep.mubr.f32.mxu0 0.0
    %672 = vmatmul.mubr.f32.gmra.mrb[0].mxu0 %v539
    %v673 = vpop.f32.mrb[0].mxu0
    %v674 = vadd.f32 %v566, %v673
    %v675 = vpop.f32.mrb[0].mxu0
    %676 = vmatprep.mubr.f32.mxu0 0.0
    %677 = vmatmul.mubr.f32.gmra.mrb[0].mxu0 %v540
    %v678 = vpop.f32.mrb[0].mxu0
    %v679 = vadd.f32 %v566, %v678
    %v680 = vpop.f32.mrb[0].mxu0
    %681 = vmatprep.mubr.f32.mxu0 0.0
    %682 = vmatmul.mubr.f32.gmra.mrb[0].mxu0 %v541
    %v683 = vpop.f32.mrb[0].mxu0
    %v684 = vadd.f32 %v566, %v683
    %v685 = vpop.f32.mrb[0].mxu0
    %686 = vmatprep.mubr.f32.mxu0 0.0
    %687 = vmatmul.mubr.f32.gmra.mrb[0].mxu0 %v542
    %v688 = vpop.f32.mrb[0].mxu0
    %v689 = vadd.f32 %v566, %v688
    %v690 = vpop.f32.mrb[0].mxu0
    %691 = vmatprep.mubr.f32.mxu0 0.0
    %692 = vmatmul.mubr.f32.gmra.mrb[0].mxu0 %v543
    %v693 = vpop.f32.mrb[0].mxu0
    %v694 = vadd.f32 %v566, %v693
    %v695 = vpop.f32.mrb[0].mxu0
    %696 = vmatprep.mubr.f32.mxu0 0.0
    %697 = vmatmul.mubr.f32.gmra.mrb[0].mxu0 %v544
    %v698 = vpop.f32.mrb[0].mxu0
    %v699 = vadd.f32 %v566, %v698
    %v700 = vpop.f32.mrb[0].mxu0
    %701 = vmatprep.mubr.f32.mxu0 0.0
    %702 = vmatmul.mubr.f32.gmra.mrb[0].mxu0 %v545
    %v703 = vpop.f32.mrb[0].mxu0
    %v704 = vadd.f32 %v566, %v703
    %v705 = vpop.f32.mrb[0].mxu0
    %706 = vmatprep.mubr.f32.mxu0 0.0
    %707 = vmatmul.mubr.f32.gmra.mrb[0].mxu0 %v546
    %v708 = vpop.f32.mrb[0].mxu0
    %v709 = vadd.f32 %v566, %v708
    %v710 = vpop.f32.mrb[0].mxu0
    %711 = vdwg.mxu0
    %v712 = vmax.f32 %v634, 0.0
    %v713 = vmax.f32 %v639, 0.0
    %v714 = vmax.f32 %v644, 0.0
    %v715 = vmax.f32 %v649, 0.0
    %v716 = vmax.f32 %v654, 0.0
    %v717 = vmax.f32 %v659, 0.0
    %v718 = vmax.f32 %v664, 0.0
    %v719 = vmax.f32 %v669, 0.0
    %v720 = vmax.f32 %v674, 0.0
    %v721 = vmax.f32 %v679, 0.0
    %v722 = vmax.f32 %v684, 0.0
    %v723 = vmax.f32 %v689, 0.0
    %v724 = vmax.f32 %v694, 0.0
    %v725 = vmax.f32 %v699, 0.0
    %v726 = vmax.f32 %v704, 0.0
    %v727 = vmax.f32 %v709, 0.0
    %v728 = vld [vmem:[#allocation2] sm:$0xff]
    %v729 = vld [vmem:[#allocation2 + $0x8] sm:$0xff]
    %v730 = vld [vmem:[#allocation2 + $0x10] sm:$0xff]
    %v731 = vld [vmem:[#allocation2 + $0x18] sm:$0xff]
    %v732 = vld [vmem:[#allocation2 + $0x20] sm:$0xff]
    %v733 = vld [vmem:[#allocation2 + $0x28] sm:$0xff]
    %v734 = vld [vmem:[#allocation2 + $0x30] sm:$0xff]
    %v735 = vld [vmem:[#allocation2 + $0x38] sm:$0xff]
    %v736 = vld [vmem:[#allocation2 + $0x40] sm:$0xff]
    %v737 = vld [vmem:[#allocation2 + $0x48] sm:$0xff]
    %v738 = vld [vmem:[#allocation2 + $0x50] sm:$0xff]
    %v739 = vld [vmem:[#allocation2 + $0x58] sm:$0xff]
    %v740 = vld [vmem:[#allocation2 + $0x60] sm:$0xff]
    %v741 = vld [vmem:[#allocation2 + $0x68] sm:$0xff]
    %v742 = vld [vmem:[#allocation2 + $0x70] sm:$0xff]
    %v743 = vld [vmem:[#allocation2 + $0x78] sm:$0xff]
    %v744 = vlaneseq
    %v745 = vshrl.u32 %v744, 7
    %v746 = vsub.s32 4, %v745
    %v747 = vrot.slane %v69, %v746
    %748 = vmatprep.subr.mxu0 0.0
    %749 = vmatpush1.msra.mxu0 %v728
    %750 = vmatprep.subr.mxu0 0.0
    %751 = vmatpush1.msra.mxu0 %v729
    %752 = vmatprep.subr.mxu0 0.0
    %753 = vmatpush1.msra.mxu0 %v730
    %754 = vmatprep.subr.mxu0 0.0
    %755 = vmatpush1.msra.mxu0 %v731
    %756 = vmatprep.subr.mxu0 0.0
    %757 = vmatpush1.msra.mxu0 %v732
    %758 = vmatprep.subr.mxu0 0.0
    %759 = vmatpush1.msra.mxu0 %v733
    %760 = vmatprep.subr.mxu0 0.0
    %761 = vmatpush1.msra.mxu0 %v734
    %762 = vmatprep.subr.mxu0 0.0
    %763 = vmatpush1.msra.mxu0 %v735
    %764 = vmatprep.subr.mxu0 0.0
    %765 = vmatpush1.msra.mxu0 %v736
    %766 = vmatprep.subr.mxu0 0.0
    %767 = vmatpush1.msra.mxu0 %v737
    %768 = vmatprep.subr.mxu0 0.0
    %769 = vmatpush1.msra.mxu0 %v738
    %770 = vmatprep.subr.mxu0 0.0
    %771 = vmatpush1.msra.mxu0 %v739
    %772 = vmatprep.subr.mxu0 0.0
    %773 = vmatpush1.msra.mxu0 %v740
    %774 = vmatprep.subr.mxu0 0.0
    %775 = vmatpush1.msra.mxu0 %v741
    %776 = vmatprep.subr.mxu0 0.0
    %777 = vmatpush1.msra.mxu0 %v742
    %778 = vmatprep.subr.mxu0 0.0
    %779 = vmatpush1.msra.mxu0 %v743
    %780 = vmatprep.subr.mxu0 0.0
    %781 = vmatpush1.msra.mxu0 0.0
    %782 = vmatprep.subr.mxu0 0.0
    %783 = vmatpush1.msra.mxu0 0.0
    %784 = vmatprep.subr.mxu0 0.0
    %785 = vmatpush1.msra.mxu0 0.0
    %786 = vmatprep.subr.mxu0 0.0
    %787 = vmatpush1.msra.mxu0 0.0
    %788 = vmatprep.subr.mxu0 0.0
    %789 = vmatpush1.msra.mxu0 0.0
    %790 = vmatprep.subr.mxu0 0.0
    %791 = vmatpush1.msra.mxu0 0.0
    %792 = vmatprep.subr.mxu0 0.0
    %793 = vmatpush1.msra.mxu0 0.0
    %794 = vmatprep.subr.mxu0 0.0
    %795 = vmatpush1.msra.mxu0 0.0
    %796 = vmatprep.subr.mxu0 0.0
    %797 = vmatpush1.msra.mxu0 0.0
    %798 = vmatprep.subr.mxu0 0.0
    %799 = vmatpush1.msra.mxu0 0.0
    %800 = vmatprep.subr.mxu0 0.0
    %801 = vmatpush1.msra.mxu0 0.0
    %802 = vmatprep.subr.mxu0 0.0
    %803 = vmatpush1.msra.mxu0 0.0
    %804 = vmatprep.subr.mxu0 0.0
    %805 = vmatpush1.msra.mxu0 0.0
    %806 = vmatprep.subr.mxu0 0.0
    %807 = vmatpush1.msra.mxu0 0.0
    %808 = vmatprep.subr.mxu0 0.0
    %809 = vmatpush1.msra.mxu0 0.0
    %810 = vmatprep.subr.mxu0 0.0
    %811 = vmatpush1.msra.mxu0 0.0
    %812 = vmatprep.mubr.f32.mxu0 0.0
    %813 = vmatmul.mubr.f32.gmra.mrb[0].mxu0 %v712
    %v814 = vpop.f32.mrb[0].mxu0
    %v815 = vadd.f32 %v747, %v814
    %v816 = vpop.f32.mrb[0].mxu0
    %817 = vmatprep.mubr.f32.mxu0 0.0
    %818 = vmatmul.mubr.f32.gmra.mrb[0].mxu0 %v713
    %v819 = vpop.f32.mrb[0].mxu0
    %v820 = vadd.f32 %v747, %v819
    %v821 = vpop.f32.mrb[0].mxu0
    %822 = vmatprep.mubr.f32.mxu0 0.0
    %823 = vmatmul.mubr.f32.gmra.mrb[0].mxu0 %v714
    %v824 = vpop.f32.mrb[0].mxu0
    %v825 = vadd.f32 %v747, %v824
    %v826 = vpop.f32.mrb[0].mxu0
    %827 = vmatprep.mubr.f32.mxu0 0.0
    %828 = vmatmul.mubr.f32.gmra.mrb[0].mxu0 %v715
    %v829 = vpop.f32.mrb[0].mxu0
    %v830 = vadd.f32 %v747, %v829
    %v831 = vpop.f32.mrb[0].mxu0
    %832 = vmatprep.mubr.f32.mxu0 0.0
    %833 = vmatmul.mubr.f32.gmra.mrb[0].mxu0 %v716
    %v834 = vpop.f32.mrb[0].mxu0
    %v835 = vadd.f32 %v747, %v834
    %v836 = vpop.f32.mrb[0].mxu0
    %837 = vmatprep.mubr.f32.mxu0 0.0
    %838 = vmatmul.mubr.f32.gmra.mrb[0].mxu0 %v717
    %v839 = vpop.f32.mrb[0].mxu0
    %v840 = vadd.f32 %v747, %v839
    %v841 = vpop.f32.mrb[0].mxu0
    %842 = vmatprep.mubr.f32.mxu0 0.0
    %843 = vmatmul.mubr.f32.gmra.mrb[0].mxu0 %v718
    %v844 = vpop.f32.mrb[0].mxu0
    %v845 = vadd.f32 %v747, %v844
    %v846 = vpop.f32.mrb[0].mxu0
    %847 = vmatprep.mubr.f32.mxu0 0.0
    %848 = vmatmul.mubr.f32.gmra.mrb[0].mxu0 %v719
    %v849 = vpop.f32.mrb[0].mxu0
    %v850 = vadd.f32 %v747, %v849
    %v851 = vpop.f32.mrb[0].mxu0
    %852 = vmatprep.mubr.f32.mxu0 0.0
    %853 = vmatmul.mubr.f32.gmra.mrb[0].mxu0 %v720
    %v854 = vpop.f32.mrb[0].mxu0
    %v855 = vadd.f32 %v747, %v854
    %v856 = vpop.f32.mrb[0].mxu0
    %857 = vmatprep.mubr.f32.mxu0 0.0
    %858 = vmatmul.mubr.f32.gmra.mrb[0].mxu0 %v721
    %v859 = vpop.f32.mrb[0].mxu0
    %v860 = vadd.f32 %v747, %v859
    %v861 = vpop.f32.mrb[0].mxu0
    %862 = vmatprep.mubr.f32.mxu0 0.0
    %863 = vmatmul.mubr.f32.gmra.mrb[0].mxu0 %v722
    %v864 = vpop.f32.mrb[0].mxu0
    %v865 = vadd.f32 %v747, %v864
    %v866 = vpop.f32.mrb[0].mxu0
    %867 = vmatprep.mubr.f32.mxu0 0.0
    %868 = vmatmul.mubr.f32.gmra.mrb[0].mxu0 %v723
    %v869 = vpop.f32.mrb[0].mxu0
    %v870 = vadd.f32 %v747, %v869
    %v871 = vpop.f32.mrb[0].mxu0
    %872 = vmatprep.mubr.f32.mxu0 0.0
    %873 = vmatmul.mubr.f32.gmra.mrb[0].mxu0 %v724
    %v874 = vpop.f32.mrb[0].mxu0
    %v875 = vadd.f32 %v747, %v874
    %v876 = vpop.f32.mrb[0].mxu0
    %877 = vmatprep.mubr.f32.mxu0 0.0
    %878 = vmatmul.mubr.f32.gmra.mrb[0].mxu0 %v725
    %v879 = vpop.f32.mrb[0].mxu0
    %v880 = vadd.f32 %v747, %v879
    %v881 = vpop.f32.mrb[0].mxu0
    %882 = vmatprep.mubr.f32.mxu0 0.0
    %883 = vmatmul.mubr.f32.gmra.mrb[0].mxu0 %v726
    %v884 = vpop.f32.mrb[0].mxu0
    %v885 = vadd.f32 %v747, %v884
    %v886 = vpop.f32.mrb[0].mxu0
    %887 = vmatprep.mubr.f32.mxu0 0.0
    %888 = vmatmul.mubr.f32.gmra.mrb[0].mxu0 %v727
    %v889 = vpop.f32.mrb[0].mxu0
    %v890 = vadd.f32 %v747, %v889
    %v891 = vpop.f32.mrb[0].mxu0
    %892 = vdwg.mxu0
    %v893 = vmax.f32 %v815, 0.0
    %v894 = vmax.f32 %v820, 0.0
    %v895 = vmax.f32 %v825, 0.0
    %v896 = vmax.f32 %v830, 0.0
    %v897 = vmax.f32 %v835, 0.0
    %v898 = vmax.f32 %v840, 0.0
    %v899 = vmax.f32 %v845, 0.0
    %v900 = vmax.f32 %v850, 0.0
    %v901 = vmax.f32 %v855, 0.0
    %v902 = vmax.f32 %v860, 0.0
    %v903 = vmax.f32 %v865, 0.0
    %v904 = vmax.f32 %v870, 0.0
    %v905 = vmax.f32 %v875, 0.0
    %v906 = vmax.f32 %v880, 0.0
    %v907 = vmax.f32 %v885, 0.0
    %v908 = vmax.f32 %v890, 0.0
    %v909 = vld [vmem:[#allocation5] sm:$0xff]
    %v910 = vld [vmem:[#allocation5 + $0x8] sm:$0xff]
    %v911 = vld [vmem:[#allocation5 + $0x10] sm:$0xff]
    %v912 = vld [vmem:[#allocation5 + $0x18] sm:$0xff]
    %v913 = vld [vmem:[#allocation5 + $0x20] sm:$0xff]
    %v914 = vld [vmem:[#allocation5 + $0x28] sm:$0xff]
    %v915 = vld [vmem:[#allocation5 + $0x30] sm:$0xff]
    %v916 = vld [vmem:[#allocation5 + $0x38] sm:$0xff]
    %v917 = vld [vmem:[#allocation5 + $0x40] sm:$0xff]
    %v918 = vld [vmem:[#allocation5 + $0x48] sm:$0xff]
    %v919 = vld [vmem:[#allocation5 + $0x50] sm:$0xff]
    %v920 = vld [vmem:[#allocation5 + $0x58] sm:$0xff]
    %v921 = vld [vmem:[#allocation5 + $0x60] sm:$0xff]
    %v922 = vld [vmem:[#allocation5 + $0x68] sm:$0xff]
    %v923 = vld [vmem:[#allocation5 + $0x70] sm:$0xff]
    %v924 = vld [vmem:[#allocation5 + $0x78] sm:$0xff]
    %v925 = vld [vmem:[#allocation5 + $0x80] sm:$0xff]
    %v926 = vld [vmem:[#allocation5 + $0x88] sm:$0xff]
    %v927 = vld [vmem:[#allocation5 + $0x90] sm:$0xff]
    %v928 = vld [vmem:[#allocation5 + $0x98] sm:$0xff]
    %v929 = vld [vmem:[#allocation5 + $0xa0] sm:$0xff]
    %v930 = vld [vmem:[#allocation5 + $0xa8] sm:$0xff]
    %v931 = vld [vmem:[#allocation5 + $0xb0] sm:$0xff]
    %v932 = vld [vmem:[#allocation5 + $0xb8] sm:$0xff]
    %v933 = vld [vmem:[#allocation5 + $0xc0] sm:$0xff]
    %v934 = vld [vmem:[#allocation5 + $0xc8] sm:$0xff]
    %v935 = vld [vmem:[#allocation5 + $0xd0] sm:$0xff]
    %v936 = vld [vmem:[#allocation5 + $0xd8] sm:$0xff]
    %v937 = vld [vmem:[#allocation5 + $0xe0] sm:$0xff]
    %v938 = vld [vmem:[#allocation5 + $0xe8] sm:$0xff]
    %v939 = vld [vmem:[#allocation5 + $0xf0] sm:$0xff]
    %v940 = vld [vmem:[#allocation5 + $0xf8] sm:$0xff]
    %v941 = vlaneseq
    %v942 = vshrl.u32 %v941, 7
    %v943 = vsub.s32 5, %v942
    %v944 = vrot.slane %v69, %v943
    %v945 = vlaneseq
    %v946 = vshrl.u32 %v945, 7
    %v947 = vsub.s32 5, %v946
    %v948 = vrot.slane %v70, %v947
    %949 = vmatprep.subr.mxu0 %v910
    %950 = vmatpush1.msra.mxu0 %v909
    %951 = vmatprep.subr.mxu0 %v912
    %952 = vmatpush1.msra.mxu0 %v911
    %953 = vmatprep.subr.mxu0 %v914
    %954 = vmatpush1.msra.mxu0 %v913
    %955 = vmatprep.subr.mxu0 %v916
    %956 = vmatpush1.msra.mxu0 %v915
    %957 = vmatprep.subr.mxu0 %v918
    %958 = vmatpush1.msra.mxu0 %v917
    %959 = vmatprep.subr.mxu0 %v920
    %960 = vmatpush1.msra.mxu0 %v919
    %961 = vmatprep.subr.mxu0 %v922
    %962 = vmatpush1.msra.mxu0 %v921
    %963 = vmatprep.subr.mxu0 %v924
    %964 = vmatpush1.msra.mxu0 %v923
    %965 = vmatprep.subr.mxu0 %v926
    %966 = vmatpush1.msra.mxu0 %v925
    %967 = vmatprep.subr.mxu0 %v928
    %968 = vmatpush1.msra.mxu0 %v927
    %969 = vmatprep.subr.mxu0 %v930
    %970 = vmatpush1.msra.mxu0 %v929
    %971 = vmatprep.subr.mxu0 %v932
    %972 = vmatpush1.msra.mxu0 %v931
    %973 = vmatprep.subr.mxu0 %v934
    %974 = vmatpush1.msra.mxu0 %v933
    %975 = vmatprep.subr.mxu0 %v936
    %976 = vmatpush1.msra.mxu0 %v935
    %977 = vmatprep.subr.mxu0 %v938
    %978 = vmatpush1.msra.mxu0 %v937
    %979 = vmatprep.subr.mxu0 %v940
    %980 = vmatpush1.msra.mxu0 %v939
    %981 = vmatprep.subr.mxu0 0.0
    %982 = vmatpush1.msra.mxu0 0.0
    %983 = vmatprep.subr.mxu0 0.0
    %984 = vmatpush1.msra.mxu0 0.0
    %985 = vmatprep.subr.mxu0 0.0
    %986 = vmatpush1.msra.mxu0 0.0
    %987 = vmatprep.subr.mxu0 0.0
    %988 = vmatpush1.msra.mxu0 0.0
    %989 = vmatprep.subr.mxu0 0.0
    %990 = vmatpush1.msra.mxu0 0.0
    %991 = vmatprep.subr.mxu0 0.0
    %992 = vmatpush1.msra.mxu0 0.0
    %993 = vmatprep.subr.mxu0 0.0
    %994 = vmatpush1.msra.mxu0 0.0
    %995 = vmatprep.subr.mxu0 0.0
    %996 = vmatpush1.msra.mxu0 0.0
    %997 = vmatprep.subr.mxu0 0.0
    %998 = vmatpush1.msra.mxu0 0.0
    %999 = vmatprep.subr.mxu0 0.0
    %1000 = vmatpush1.msra.mxu0 0.0
    %1001 = vmatprep.subr.mxu0 0.0
    %1002 = vmatpush1.msra.mxu0 0.0
    %1003 = vmatprep.subr.mxu0 0.0
    %1004 = vmatpush1.msra.mxu0 0.0
    %1005 = vmatprep.subr.mxu0 0.0
    %1006 = vmatpush1.msra.mxu0 0.0
    %1007 = vmatprep.subr.mxu0 0.0
    %1008 = vmatpush1.msra.mxu0 0.0
    %1009 = vmatprep.subr.mxu0 0.0
    %1010 = vmatpush1.msra.mxu0 0.0
    %1011 = vmatprep.subr.mxu0 0.0
    %1012 = vmatpush1.msra.mxu0 0.0
    %1013 = vmatprep.mubr.f32.mxu0 0.0
    %1014 = vmatmul.mubr.f32.gmra.mrb[0].mxu0 %v893
    %v1015 = vpop.f32.mrb[0].mxu0
    %v1016 = vadd.f32 %v944, %v1015
    %v1017 = vpop.f32.mrb[0].mxu0
    %v1018 = vadd.f32 %v948, %v1017
    %1019 = vmatprep.mubr.f32.mxu0 0.0
    %1020 = vmatmul.mubr.f32.gmra.mrb[0].mxu0 %v894
    %v1021 = vpop.f32.mrb[0].mxu0
    %v1022 = vadd.f32 %v944, %v1021
    %v1023 = vpop.f32.mrb[0].mxu0
    %v1024 = vadd.f32 %v948, %v1023
    %1025 = vmatprep.mubr.f32.mxu0 0.0
    %1026 = vmatmul.mubr.f32.gmra.mrb[0].mxu0 %v895
    %v1027 = vpop.f32.mrb[0].mxu0
    %v1028 = vadd.f32 %v944, %v1027
    %v1029 = vpop.f32.mrb[0].mxu0
    %v1030 = vadd.f32 %v948, %v1029
    %1031 = vmatprep.mubr.f32.mxu0 0.0
    %1032 = vmatmul.mubr.f32.gmra.mrb[0].mxu0 %v896
    %v1033 = vpop.f32.mrb[0].mxu0
    %v1034 = vadd.f32 %v944, %v1033
    %v1035 = vpop.f32.mrb[0].mxu0
    %v1036 = vadd.f32 %v948, %v1035
    %1037 = vmatprep.mubr.f32.mxu0 0.0
    %1038 = vmatmul.mubr.f32.gmra.mrb[0].mxu0 %v897
    %v1039 = vpop.f32.mrb[0].mxu0
    %v1040 = vadd.f32 %v944, %v1039
    %v1041 = vpop.f32.mrb[0].mxu0
    %v1042 = vadd.f32 %v948, %v1041
    %1043 = vmatprep.mubr.f32.mxu0 0.0
    %1044 = vmatmul.mubr.f32.gmra.mrb[0].mxu0 %v898
    %v1045 = vpop.f32.mrb[0].mxu0
    %v1046 = vadd.f32 %v944, %v1045
    %v1047 = vpop.f32.mrb[0].mxu0
    %v1048 = vadd.f32 %v948, %v1047
    %1049 = vmatprep.mubr.f32.mxu0 0.0
    %1050 = vmatmul.mubr.f32.gmra.mrb[0].mxu0 %v899
    %v1051 = vpop.f32.mrb[0].mxu0
    %v1052 = vadd.f32 %v944, %v1051
    %v1053 = vpop.f32.mrb[0].mxu0
    %v1054 = vadd.f32 %v948, %v1053
    %1055 = vmatprep.mubr.f32.mxu0 0.0
    %1056 = vmatmul.mubr.f32.gmra.mrb[0].mxu0 %v900
    %v1057 = vpop.f32.mrb[0].mxu0
    %v1058 = vadd.f32 %v944, %v1057
    %v1059 = vpop.f32.mrb[0].mxu0
    %v1060 = vadd.f32 %v948, %v1059
    %1061 = vmatprep.mubr.f32.mxu0 0.0
    %1062 = vmatmul.mubr.f32.gmra.mrb[0].mxu0 %v901
    %v1063 = vpop.f32.mrb[0].mxu0
    %v1064 = vadd.f32 %v944, %v1063
    %v1065 = vpop.f32.mrb[0].mxu0
    %v1066 = vadd.f32 %v948, %v1065
    %1067 = vmatprep.mubr.f32.mxu0 0.0
    %1068 = vmatmul.mubr.f32.gmra.mrb[0].mxu0 %v902
    %v1069 = vpop.f32.mrb[0].mxu0
    %v1070 = vadd.f32 %v944, %v1069
    %v1071 = vpop.f32.mrb[0].mxu0
    %v1072 = vadd.f32 %v948, %v1071
    %1073 = vmatprep.mubr.f32.mxu0 0.0
    %1074 = vmatmul.mubr.f32.gmra.mrb[0].mxu0 %v903
    %v1075 = vpop.f32.mrb[0].mxu0
    %v1076 = vadd.f32 %v944, %v1075
    %v1077 = vpop.f32.mrb[0].mxu0
    %v1078 = vadd.f32 %v948, %v1077
    %1079 = vmatprep.mubr.f32.mxu0 0.0
    %1080 = vmatmul.mubr.f32.gmra.mrb[0].mxu0 %v904
    %v1081 = vpop.f32.mrb[0].mxu0
    %v1082 = vadd.f32 %v944, %v1081
    %v1083 = vpop.f32.mrb[0].mxu0
    %v1084 = vadd.f32 %v948, %v1083
    %1085 = vmatprep.mubr.f32.mxu0 0.0
    %1086 = vmatmul.mubr.f32.gmra.mrb[0].mxu0 %v905
    %v1087 = vpop.f32.mrb[0].mxu0
    %v1088 = vadd.f32 %v944, %v1087
    %v1089 = vpop.f32.mrb[0].mxu0
    %v1090 = vadd.f32 %v948, %v1089
    %1091 = vmatprep.mubr.f32.mxu0 0.0
    %1092 = vmatmul.mubr.f32.gmra.mrb[0].mxu0 %v906
    %v1093 = vpop.f32.mrb[0].mxu0
    %v1094 = vadd.f32 %v944, %v1093
    %v1095 = vpop.f32.mrb[0].mxu0
    %v1096 = vadd.f32 %v948, %v1095
    %1097 = vmatprep.mubr.f32.mxu0 0.0
    %1098 = vmatmul.mubr.f32.gmra.mrb[0].mxu0 %v907
    %v1099 = vpop.f32.mrb[0].mxu0
    %v1100 = vadd.f32 %v944, %v1099
    %v1101 = vpop.f32.mrb[0].mxu0
    %v1102 = vadd.f32 %v948, %v1101
    %1103 = vmatprep.mubr.f32.mxu0 0.0
    %1104 = vmatmul.mubr.f32.gmra.mrb[0].mxu0 %v908
    %v1105 = vpop.f32.mrb[0].mxu0
    %v1106 = vadd.f32 %v944, %v1105
    %v1107 = vpop.f32.mrb[0].mxu0
    %v1108 = vadd.f32 %v948, %v1107
    %1109 = vdwg.mxu0
    %v1110 = vmax.f32 %v1016, 0.0
    %v1111 = vmax.f32 %v1018, 0.0
    %v1112 = vmax.f32 %v1022, 0.0
    %v1113 = vmax.f32 %v1024, 0.0
    %v1114 = vmax.f32 %v1028, 0.0
    %v1115 = vmax.f32 %v1030, 0.0
    %v1116 = vmax.f32 %v1034, 0.0
    %v1117 = vmax.f32 %v1036, 0.0
    %v1118 = vmax.f32 %v1040, 0.0
    %v1119 = vmax.f32 %v1042, 0.0
    %v1120 = vmax.f32 %v1046, 0.0
    %v1121 = vmax.f32 %v1048, 0.0
    %v1122 = vmax.f32 %v1052, 0.0
    %v1123 = vmax.f32 %v1054, 0.0
    %v1124 = vmax.f32 %v1058, 0.0
    %v1125 = vmax.f32 %v1060, 0.0
    %v1126 = vmax.f32 %v1064, 0.0
    %v1127 = vmax.f32 %v1066, 0.0
    %v1128 = vmax.f32 %v1070, 0.0
    %v1129 = vmax.f32 %v1072, 0.0
    %v1130 = vmax.f32 %v1076, 0.0
    %v1131 = vmax.f32 %v1078, 0.0
    %v1132 = vmax.f32 %v1082, 0.0
    %v1133 = vmax.f32 %v1084, 0.0
    %v1134 = vmax.f32 %v1088, 0.0
    %v1135 = vmax.f32 %v1090, 0.0
    %v1136 = vmax.f32 %v1094, 0.0
    %v1137 = vmax.f32 %v1096, 0.0
    %v1138 = vmax.f32 %v1100, 0.0
    %v1139 = vmax.f32 %v1102, 0.0
    %v1140 = vmax.f32 %v1106, 0.0
    %v1141 = vmax.f32 %v1108, 0.0
    %v1142 = vld [vmem:[#allocation7] sm:$0xff]
    %v1143 = vld [vmem:[#allocation7 + $0x8] sm:$0xff]
    %v1144 = vld [vmem:[%s7] sm:$0xff]
    %1146 = vset.pattern.permute.xlu0 0
    %1147 = vperm.xlu0 %1146, %v1144
    %v1148 = vpop.permute.xlu0 %1147
    %1150 = vmatprep.subr.mxu0 %v1111
    %1151 = vmatpush1.xpose.msra.mxu0 %v1110
    %1152 = vmatprep.subr.mxu0 %v1113
    %1153 = vmatpush1.xpose.msra.mxu0 %v1112
    %1154 = vmatprep.subr.mxu0 %v1115
    %1155 = vmatpush1.xpose.msra.mxu0 %v1114
    %1156 = vmatprep.subr.mxu0 %v1117
    %1157 = vmatpush1.xpose.msra.mxu0 %v1116
    %1158 = vmatprep.subr.mxu0 %v1119
    %1159 = vmatpush1.xpose.msra.mxu0 %v1118
    %1160 = vmatprep.subr.mxu0 %v1121
    %1161 = vmatpush1.xpose.msra.mxu0 %v1120
    %1162 = vmatprep.subr.mxu0 %v1123
    %1163 = vmatpush1.xpose.msra.mxu0 %v1122
    %1164 = vmatprep.subr.mxu0 %v1125
    %1165 = vmatpush1.xpose.msra.mxu0 %v1124
    %1166 = vmatprep.subr.mxu0 %v1127
    %1167 = vmatpush1.xpose.msra.mxu0 %v1126
    %1168 = vmatprep.subr.mxu0 %v1129
    %1169 = vmatpush1.xpose.msra.mxu0 %v1128
    %1170 = vmatprep.subr.mxu0 %v1131
    %1171 = vmatpush1.xpose.msra.mxu0 %v1130
    %1172 = vmatprep.subr.mxu0 %v1133
    %1173 = vmatpush1.xpose.msra.mxu0 %v1132
    %1174 = vmatprep.subr.mxu0 %v1135
    %1175 = vmatpush1.xpose.msra.mxu0 %v1134
    %1176 = vmatprep.subr.mxu0 %v1137
    %1177 = vmatpush1.xpose.msra.mxu0 %v1136
    %1178 = vmatprep.subr.mxu0 %v1139
    %1179 = vmatpush1.xpose.msra.mxu0 %v1138
    %1180 = vmatprep.subr.mxu0 %v1141
    %1181 = vmatpush1.xpose.msra.mxu0 %v1140
    %1182 = vmatprep.subr.mxu0 0.0
    %1183 = vmatpush1.xpose.msra.mxu0 0.0
    %1184 = vmatprep.subr.mxu0 0.0
    %1185 = vmatpush1.xpose.msra.mxu0 0.0
    %1186 = vmatprep.subr.mxu0 0.0
    %1187 = vmatpush1.xpose.msra.mxu0 0.0
    %1188 = vmatprep.subr.mxu0 0.0
    %1189 = vmatpush1.xpose.msra.mxu0 0.0
    %1190 = vmatprep.subr.mxu0 0.0
    %1191 = vmatpush1.xpose.msra.mxu0 0.0
    %1192 = vmatprep.subr.mxu0 0.0
    %1193 = vmatpush1.xpose.msra.mxu0 0.0
    %1194 = vmatprep.subr.mxu0 0.0
    %1195 = vmatpush1.xpose.msra.mxu0 0.0
    %1196 = vmatprep.subr.mxu0 0.0
    %1197 = vmatpush1.xpose.msra.mxu0 0.0
    %1198 = vmatprep.subr.mxu0 0.0
    %1199 = vmatpush1.xpose.msra.mxu0 0.0
    %1200 = vmatprep.subr.mxu0 0.0
    %1201 = vmatpush1.xpose.msra.mxu0 0.0
    %1202 = vmatprep.subr.mxu0 0.0
    %1203 = vmatpush1.xpose.msra.mxu0 0.0
    %1204 = vmatprep.subr.mxu0 0.0
    %1205 = vmatpush1.xpose.msra.mxu0 0.0
    %1206 = vmatprep.subr.mxu0 0.0
    %1207 = vmatpush1.xpose.msra.mxu0 0.0
    %1208 = vmatprep.subr.mxu0 0.0
    %1209 = vmatpush1.xpose.msra.mxu0 0.0
    %1210 = vmatprep.subr.mxu0 0.0
    %1211 = vmatpush1.xpose.msra.mxu0 0.0
    %1212 = vmatprep.subr.mxu0 0.0
    %1213 = vmatpush1.xpose.msra.mxu0 0.0
    %1214 = vmatprep.mubr.f32.mxu0 %v1143
    %1215 = vmatmul.mubr.f32.gmra.mrb[0].mxu0 %v1142
    %v1216 = vpop.f32.mrb[0].mxu0
    %v1217 = vadd.f32 %v1148, %v1216
    %v1218 = vpop.f32.mrb[0].mxu0
    %1219 = vdwg.mxu0
    %1220 = vst [vmem:[#allocation8] sm:$0xff] %v1217
    // Predicated region
    $region46: #{tpu_custom_call.1} parent=1 // pred_check
      _
    $region47: #{tpu_custom_call.1} parent=1 // pred_check_branch
      %1222 = sbr.rel (0) target = $region49
    $region48: #{tpu_custom_call.1} parent=1 // pred_region
      %s1224 = ssub.s32 128, 128
      %1225 = vsyncadd [#allocation4], %s1224
      %s1227 = sshll.u32 [#allocation8], 4
      %s1228 = int_to_ptr.vmem [resolvable:$true] %s1227
      %1230 = dma.vmem_to_hbm [thread:$0]  %s1228, 128, %s8, [#allocation4]
    $region49: #{tpu_custom_call.1} parent=1 // pred_fallthru
      _
    // Predicated region
    $region50: #{tpu_custom_call.1} parent=1 // pred_check
      _
    $region51: #{tpu_custom_call.1} parent=1 // pred_check_branch
      %1232 = sbr.rel (0) target = $region53
    $region52: #{tpu_custom_call.1} parent=1 // pred_region
      %1233 = dma.done [#allocation4], 128
    $region53: #{tpu_custom_call.1} parent=1 // pred_fallthru
      _
    %1234 = vsyncpa [#allocation3], 1
    %1235 = vsyncpa [#allocation6], 1
    %1236 = vsyncpa [#allocation4], 1

// kernel: tpu_custom_call.1
$region0: #{tpu_custom_call.1}
  #allocation0 [shape = 'u32[]', space=smem, size = 0x4, offset = 0x4, fixed_abs, tag = 'smem constant byte address 0x4 - core index']
  #allocation1 [shape = 'u32[144,128]{1,0:T(1,128)}', space=vmem, size = 0x12000, scoped, tag = 'internal scratch']
  %s0 = inlined_call_operand.vmem [shape: f32[128,38], index: 0, kind: input, shape index: {}]
  %s1 = inlined_call_operand.vmem [shape: f32[38,128], index: 1, kind: input, shape index: {}]
  %s2 = inlined_call_operand.vmem [shape: f32[8,256], index: 2, kind: input, shape index: {}]
  %s3 = inlined_call_operand.vmem [shape: f32[128,128], index: 3, kind: input, shape index: {}]
  %s4 = inlined_call_operand.hbm [shape: f32[128,128], index: 4, kind: input, shape index: {}]
  %s5 = inlined_call_operand.hbm [shape: f32[128,256], index: 5, kind: input, shape index: {}]
  %s6 = inlined_call_operand.hbm [shape: f32[8,256], index: 6, kind: input, shape index: {}]
  %s7 = inlined_call_operand.vmem [shape: f32[8,1], index: 7, kind: input, shape index: {}]
  %s8 = inlined_call_operand.hbm [shape: f32[8,128], index: 8, kind: output, shape index: {}]
  %s9 = sld [smem:[#allocation0]]
  $region54: #{tpu_custom_call.1} parent=0
    _
  %s11 = ssub.s32 1, %s9
  %s12 = scalar_select 0, %s11, %s9
  $region1: #{tpu_custom_call.1} parent=0
    #allocation2 [shape = 'u8[65536]{0}', space=vmem, size = 0x10000, scoped, tag = 'input window, operand 4, single buffered']
    #allocation3 [shape = 's32[1]{0}', space=sflag, size = 0x4, scoped, tag = 'scoped memory for tpu_custom_call.1']
    #allocation4 [shape = 's32[1]{0}', space=sflag, size = 0x4, scoped, tag = 'scoped memory for tpu_custom_call.1']
    #allocation5 [shape = 'u8[131072]{0}', space=vmem, size = 0x20000, scoped, tag = 'input window, operand 5, single buffered']
    #allocation6 [shape = 's32[1]{0}', space=sflag, size = 0x4, scoped, tag = 'scoped memory for tpu_custom_call.1']
    #allocation7 [shape = 'u8[8192]{0}', space=vmem, size = 0x2000, scoped, tag = 'input window, operand 6, single buffered']
    #allocation8 [shape = 'u8[4096]{0}', space=vmem, size = 0x1000, scoped, tag = 'output window, operand 0, single buffered']
    %13 = vsyncpa [#allocation3], 0
    %14 = vsyncpa [#allocation6], 0
    %15 = vsyncpa [#allocation4], 0
    // Predicated region
    $region2: #{tpu_custom_call.1} parent=1 // pred_check
      _
    $region3: #{tpu_custom_call.1} parent=1 // pred_check_branch
      %17 = sbr.rel (0) target = $region5
    $region4: #{tpu_custom_call.1} parent=1 // pred_region
      _
    $region5: #{tpu_custom_call.1} parent=1 // pred_fallthru
      _
    // Predicated region
    $region6: #{tpu_custom_call.1} parent=1 // pred_check
      _
    $region7: #{tpu_custom_call.1} parent=1 // pred_check_branch
      %19 = sbr.rel (0) target = $region9
    $region8: #{tpu_custom_call.1} parent=1 // pred_region
      _
    $region9: #{tpu_custom_call.1} parent=1 // pred_fallthru
      _
    // Predicated region
    $region10: #{tpu_custom_call.1} parent=1 // pred_check
      _
    $region11: #{tpu_custom_call.1} parent=1 // pred_check_branch
      %21 = sbr.rel (0) target = $region13
    $region12: #{tpu_custom_call.1} parent=1 // pred_region
      _
    $region13: #{tpu_custom_call.1} parent=1 // pred_fallthru
      _
    // Predicated region
    $region14: #{tpu_custom_call.1} parent=1 // pred_check
      _
    $region15: #{tpu_custom_call.1} parent=1 // pred_check_branch
      %23 = sbr.rel (0) target = $region17
    $region16: #{tpu_custom_call.1} parent=1 // pred_region
      _
    $region17: #{tpu_custom_call.1} parent=1 // pred_fallthru
      _
    // Predicated region
    $region18: #{tpu_custom_call.1} parent=1 // pred_check
      _
    $region19: #{tpu_custom_call.1} parent=1 // pred_check_branch
      %25 = sbr.rel (0) target = $region21
    $region20: #{tpu_custom_call.1} parent=1 // pred_region
      %s27 = ssub.s32 2048, 2048
      %28 = vsyncadd [#allocation3], %s27
      %s29 = sshll.u32 [#allocation2], 4
      %s30 = int_to_ptr.vmem [resolvable:$true] %s29
      %35 = dma.hbm_to_vmem [thread:$0]  %s4, 2048, %s30, [#allocation3], 128, 128, 8
    $region21: #{tpu_custom_call.1} parent=1 // pred_fallthru
      _
    // Predicated region
    $region22: #{tpu_custom_call.1} parent=1 // pred_check
      _
    $region23: #{tpu_custom_call.1} parent=1 // pred_check_branch
      %37 = sbr.rel (0) target = $region25
    $region24: #{tpu_custom_call.1} parent=1 // pred_region
      %s39 = ssub.s32 4096, 4096
      %40 = vsyncadd [#allocation6], %s39
      %s41 = sshll.u32 [#allocation5], 4
      %s42 = int_to_ptr.vmem [resolvable:$true] %s41
      %47 = dma.hbm_to_vmem [thread:$0]  %s5, 4096, %s42, [#allocation6], 256, 256, 16
    $region25: #{tpu_custom_call.1} parent=1 // pred_fallthru
      _
    // Predicated region
    $region26: #{tpu_custom_call.1} parent=1 // pred_check
      _
    $region27: #{tpu_custom_call.1} parent=1 // pred_check_branch
      %49 = sbr.rel (0) target = $region29
    $region28: #{tpu_custom_call.1} parent=1 // pred_region
      %s51 = ssub.s32 256, 256
      %52 = vsyncadd [#allocation6], %s51
      %s54 = sshll.u32 [#allocation7], 4
      %s55 = int_to_ptr.vmem [resolvable:$true] %s54
      %57 = dma.hbm_to_vmem [thread:$0]  %s6, 256, %s55, [#allocation6]
    $region29: #{tpu_custom_call.1} parent=1 // pred_fallthru
      _
    // Predicated region
    $region30: #{tpu_custom_call.1} parent=1 // pred_check
      _
    $region31: #{tpu_custom_call.1} parent=1 // pred_check_branch
      %59 = sbr.rel (0) target = $region33
    $region32: #{tpu_custom_call.1} parent=1 // pred_region
      _
    $region33: #{tpu_custom_call.1} parent=1 // pred_fallthru
      _
    // Predicated region
    $region34: #{tpu_custom_call.1} parent=1 // pred_check
      _
    $region35: #{tpu_custom_call.1} parent=1 // pred_check_branch
      %61 = sbr.rel (0) target = $region37
    $region36: #{tpu_custom_call.1} parent=1 // pred_region
      %62 = dma.done [#allocation3], 2048
    $region37: #{tpu_custom_call.1} parent=1 // pred_fallthru
      _
    // Predicated region
    $region38: #{tpu_custom_call.1} parent=1 // pred_check
      _
    $region39: #{tpu_custom_call.1} parent=1 // pred_check_branch
      %64 = sbr.rel (0) target = $region41
    $region40: #{tpu_custom_call.1} parent=1 // pred_region
      %65 = dma.done [#allocation6], 4096
    $region41: #{tpu_custom_call.1} parent=1 // pred_fallthru
      _
    // Predicated region
    $region42: #{tpu_custom_call.1} parent=1 // pred_check
      _
    $region43: #{tpu_custom_call.1} parent=1 // pred_check_branch
      %67 = sbr.rel (0) target = $region45
    $region44: #{tpu_custom_call.1} parent=1 // pred_region
      %68 = dma.done [#allocation6], 256
    $region45: #{tpu_custom_call.1} parent=1 // pred_fallthru
      _
    %v69 = vld [vmem:[%s2] sm:$0xff]
    %v70 = vld [vmem:[%s2 + $0x8] sm:$0xff]
    %v71 = vld [vmem:[%s0] sm:$0xff]
    %v72 = vld [vmem:[%s0 + $0x8] sm:$0xff]
    %v73 = vld [vmem:[%s0 + $0x10] sm:$0xff]
    %v74 = vld [vmem:[%s0 + $0x18] sm:$0xff]
    %v75 = vld [vmem:[%s0 + $0x20] sm:$0xff]
    %v76 = vld [vmem:[%s0 + $0x28] sm:$0xff]
    %v77 = vld [vmem:[%s0 + $0x30] sm:$0xff]
    %v78 = vld [vmem:[%s0 + $0x38] sm:$0xff]
    %v79 = vld [vmem:[%s0 + $0x40] sm:$0xff]
    %v80 = vld [vmem:[%s0 + $0x48] sm:$0xff]
    %v81 = vld [vmem:[%s0 + $0x50] sm:$0xff]
    %v82 = vld [vmem:[%s0 + $0x58] sm:$0xff]
    %v83 = vld [vmem:[%s0 + $0x60] sm:$0xff]
    %v84 = vld [vmem:[%s0 + $0x68] sm:$0xff]
    %v85 = vld [vmem:[%s0 + $0x70] sm:$0xff]
    %v86 = vld [vmem:[%s0 + $0x78] sm:$0xff]
    %v87 = vld [vmem:[%s1] sm:$0xff]
    %v88 = vld [vmem:[%s1 + $0x8] sm:$0xff]
    %v89 = vld [vmem:[%s1 + $0x10] sm:$0xff]
    %v90 = vld [vmem:[%s1 + $0x18] sm:$0xff]
    %v91 = vld [vmem:[%s1 + $0x20] sm:$0x3f]
    %v92 = vlaneseq
    %v93 = vshrl.u32 %v92, 7
    %v94 = vsub.s32 0, %v93
    %v95 = vrot.slane %v69, %v94
    %vm96 = vcmask 310272
    %v98 = vsel %vm96, %v71, 0
    %v101 = vsel %vm96, %v72, 0
    %v104 = vsel %vm96, %v73, 0
    %v107 = vsel %vm96, %v74, 0
    %v110 = vsel %vm96, %v75, 0
    %v113 = vsel %vm96, %v76, 0
    %v116 = vsel %vm96, %v77, 0
    %v119 = vsel %vm96, %v78, 0
    %v122 = vsel %vm96, %v79, 0
    %v125 = vsel %vm96, %v80, 0
    %v128 = vsel %vm96, %v81, 0
    %v131 = vsel %vm96, %v82, 0
    %v134 = vsel %vm96, %v83, 0
    %v137 = vsel %vm96, %v84, 0
    %v140 = vsel %vm96, %v85, 0
    %v143 = vsel %vm96, %v86, 0
    %vm145 = vcmask 1045504
    %v147 = vsel %vm145, %v91, 0
    %149 = vmatprep.subr.mxu0 0.0
    %150 = vmatpush1.msra.mxu0 %v87
    %151 = vmatprep.subr.mxu0 0.0
    %152 = vmatpush1.msra.mxu0 %v88
    %153 = vmatprep.subr.mxu0 0.0
    %154 = vmatpush1.msra.mxu0 %v89
    %155 = vmatprep.subr.mxu0 0.0
    %156 = vmatpush1.msra.mxu0 %v90
    %157 = vmatprep.subr.mxu0 0.0
    %158 = vmatpush1.msra.mxu0 %v147
    %159 = vmatprep.subr.mxu0 0.0
    %160 = vmatpush1.msra.mxu0 0.0
    %161 = vmatprep.subr.mxu0 0.0
    %162 = vmatpush1.msra.mxu0 0.0
    %163 = vmatprep.subr.mxu0 0.0
    %164 = vmatpush1.msra.mxu0 0.0
    %165 = vmatprep.subr.mxu0 0.0
    %166 = vmatpush1.msra.mxu0 0.0
    %167 = vmatprep.subr.mxu0 0.0
    %168 = vmatpush1.msra.mxu0 0.0
    %169 = vmatprep.subr.mxu0 0.0
    %170 = vmatpush1.msra.mxu0 0.0
    %171 = vmatprep.subr.mxu0 0.0
    %172 = vmatpush1.msra.mxu0 0.0
    %173 = vmatprep.subr.mxu0 0.0
    %174 = vmatpush1.msra.mxu0 0.0
    %175 = vmatprep.subr.mxu0 0.0
    %176 = vmatpush1.msra.mxu0 0.0
    %177 = vmatprep.subr.mxu0 0.0
    %178 = vmatpush1.msra.mxu0 0.0
    %179 = vmatprep.subr.mxu0 0.0
    %180 = vmatpush1.msra.mxu0 0.0
    %181 = vmatprep.subr.mxu0 0.0
    %182 = vmatpush1.msra.mxu0 0.0
    %183 = vmatprep.subr.mxu0 0.0
    %184 = vmatpush1.msra.mxu0 0.0
    %185 = vmatprep.subr.mxu0 0.0
    %186 = vmatpush1.msra.mxu0 0.0
    %187 = vmatprep.subr.mxu0 0.0
    %188 = vmatpush1.msra.mxu0 0.0
    %189 = vmatprep.subr.mxu0 0.0
    %190 = vmatpush1.msra.mxu0 0.0
    %191 = vmatprep.subr.mxu0 0.0
    %192 = vmatpush1.msra.mxu0 0.0
    %193 = vmatprep.subr.mxu0 0.0
    %194 = vmatpush1.msra.mxu0 0.0
    %195 = vmatprep.subr.mxu0 0.0
    %196 = vmatpush1.msra.mxu0 0.0
    %197 = vmatprep.subr.mxu0 0.0
    %198 = vmatpush1.msra.mxu0 0.0
    %199 = vmatprep.subr.mxu0 0.0
    %200 = vmatpush1.msra.mxu0 0.0
    %201 = vmatprep.subr.mxu0 0.0
    %202 = vmatpush1.msra.mxu0 0.0
    %203 = vmatprep.subr.mxu0 0.0
    %204 = vmatpush1.msra.mxu0 0.0
    %205 = vmatprep.subr.mxu0 0.0
    %206 = vmatpush1.msra.mxu0 0.0
    %207 = vmatprep.subr.mxu0 0.0
    %208 = vmatpush1.msra.mxu0 0.0
    %209 = vmatprep.subr.mxu0 0.0
    %210 = vmatpush1.msra.mxu0 0.0
    %211 = vmatprep.subr.mxu0 0.0
    %212 = vmatpush1.msra.mxu0 0.0
    %213 = vmatprep.mubr.f32.mxu0 0.0
    %214 = vmatmul.mubr.f32.gmra.mrb[0].mxu0 %v98
    %v215 = vpop.f32.mrb[0].mxu0
    %v216 = vadd.f32 %v95, %v215
    %v217 = vpop.f32.mrb[0].mxu0
    %218 = vmatprep.mubr.f32.mxu0 0.0
    %219 = vmatmul.mubr.f32.gmra.mrb[0].mxu0 %v101
    %v220 = vpop.f32.mrb[0].mxu0
    %v221 = vadd.f32 %v95, %v220
    %v222 = vpop.f32.mrb[0].mxu0
    %223 = vmatprep.mubr.f32.mxu0 0.0
    %224 = vmatmul.mubr.f32.gmra.mrb[0].mxu0 %v104
    %v225 = vpop.f32.mrb[0].mxu0
    %v226 = vadd.f32 %v95, %v225
    %v227 = vpop.f32.mrb[0].mxu0
    %228 = vmatprep.mubr.f32.mxu0 0.0
    %229 = vmatmul.mubr.f32.gmra.mrb[0].mxu0 %v107
    %v230 = vpop.f32.mrb[0].mxu0
    %v231 = vadd.f32 %v95, %v230
    %v232 = vpop.f32.mrb[0].mxu0
    %233 = vmatprep.mubr.f32.mxu0 0.0
    %234 = vmatmul.mubr.f32.gmra.mrb[0].mxu0 %v110
    %v235 = vpop.f32.mrb[0].mxu0
    %v236 = vadd.f32 %v95, %v235
    %v237 = vpop.f32.mrb[0].mxu0
    %238 = vmatprep.mubr.f32.mxu0 0.0
    %239 = vmatmul.mubr.f32.gmra.mrb[0].mxu0 %v113
    %v240 = vpop.f32.mrb[0].mxu0
    %v241 = vadd.f32 %v95, %v240
    %v242 = vpop.f32.mrb[0].mxu0
    %243 = vmatprep.mubr.f32.mxu0 0.0
    %244 = vmatmul.mubr.f32.gmra.mrb[0].mxu0 %v116
    %v245 = vpop.f32.mrb[0].mxu0
    %v246 = vadd.f32 %v95, %v245
    %v247 = vpop.f32.mrb[0].mxu0
    %248 = vmatprep.mubr.f32.mxu0 0.0
    %249 = vmatmul.mubr.f32.gmra.mrb[0].mxu0 %v119
    %v250 = vpop.f32.mrb[0].mxu0
    %v251 = vadd.f32 %v95, %v250
    %v252 = vpop.f32.mrb[0].mxu0
    %253 = vmatprep.mubr.f32.mxu0 0.0
    %254 = vmatmul.mubr.f32.gmra.mrb[0].mxu0 %v122
    %v255 = vpop.f32.mrb[0].mxu0
    %v256 = vadd.f32 %v95, %v255
    %v257 = vpop.f32.mrb[0].mxu0
    %258 = vmatprep.mubr.f32.mxu0 0.0
    %259 = vmatmul.mubr.f32.gmra.mrb[0].mxu0 %v125
    %v260 = vpop.f32.mrb[0].mxu0
    %v261 = vadd.f32 %v95, %v260
    %v262 = vpop.f32.mrb[0].mxu0
    %263 = vmatprep.mubr.f32.mxu0 0.0
    %264 = vmatmul.mubr.f32.gmra.mrb[0].mxu0 %v128
    %v265 = vpop.f32.mrb[0].mxu0
    %v266 = vadd.f32 %v95, %v265
    %v267 = vpop.f32.mrb[0].mxu0
    %268 = vmatprep.mubr.f32.mxu0 0.0
    %269 = vmatmul.mubr.f32.gmra.mrb[0].mxu0 %v131
    %v270 = vpop.f32.mrb[0].mxu0
    %v271 = vadd.f32 %v95, %v270
    %v272 = vpop.f32.mrb[0].mxu0
    %273 = vmatprep.mubr.f32.mxu0 0.0
    %274 = vmatmul.mubr.f32.gmra.mrb[0].mxu0 %v134
    %v275 = vpop.f32.mrb[0].mxu0
    %v276 = vadd.f32 %v95, %v275
    %v277 = vpop.f32.mrb[0].mxu0
    %278 = vmatprep.mubr.f32.mxu0 0.0
    %279 = vmatmul.mubr.f32.gmra.mrb[0].mxu0 %v137
    %v280 = vpop.f32.mrb[0].mxu0
    %v281 = vadd.f32 %v95, %v280
    %v282 = vpop.f32.mrb[0].mxu0
    %283 = vmatprep.mubr.f32.mxu0 0.0
    %284 = vmatmul.mubr.f32.gmra.mrb[0].mxu0 %v140
    %v285 = vpop.f32.mrb[0].mxu0
    %v286 = vadd.f32 %v95, %v285
    %v287 = vpop.f32.mrb[0].mxu0
    %288 = vmatprep.mubr.f32.mxu0 0.0
    %289 = vmatmul.mubr.f32.gmra.mrb[0].mxu0 %v143
    %v290 = vpop.f32.mrb[0].mxu0
    %v291 = vadd.f32 %v95, %v290
    %v292 = vpop.f32.mrb[0].mxu0
    %293 = vdwg.mxu0
    %294 = vadd.xlane.f32.xlu0 %v216
    %v295 = vpop.xlane.xlu0 %294
    %296 = vadd.xlane.f32.xlu0 %v221
    %v297 = vpop.xlane.xlu0 %296
    %298 = vadd.xlane.f32.xlu0 %v226
    %v299 = vpop.xlane.xlu0 %298
    %300 = vadd.xlane.f32.xlu0 %v231
    %v301 = vpop.xlane.xlu0 %300
    %302 = vadd.xlane.f32.xlu0 %v236
    %v303 = vpop.xlane.xlu0 %302
    %304 = vadd.xlane.f32.xlu0 %v241
    %v305 = vpop.xlane.xlu0 %304
    %306 = vadd.xlane.f32.xlu0 %v246
    %v307 = vpop.xlane.xlu0 %306
    %308 = vadd.xlane.f32.xlu0 %v251
    %v309 = vpop.xlane.xlu0 %308
    %310 = vadd.xlane.f32.xlu0 %v256
    %v311 = vpop.xlane.xlu0 %310
    %312 = vadd.xlane.f32.xlu0 %v261
    %v313 = vpop.xlane.xlu0 %312
    %314 = vadd.xlane.f32.xlu0 %v266
    %v315 = vpop.xlane.xlu0 %314
    %316 = vadd.xlane.f32.xlu0 %v271
    %v317 = vpop.xlane.xlu0 %316
    %318 = vadd.xlane.f32.xlu0 %v276
    %v319 = vpop.xlane.xlu0 %318
    %320 = vadd.xlane.f32.xlu0 %v281
    %v321 = vpop.xlane.xlu0 %320
    %322 = vadd.xlane.f32.xlu0 %v286
    %v323 = vpop.xlane.xlu0 %322
    %324 = vadd.xlane.f32.xlu0 %v291
    %v325 = vpop.xlane.xlu0 %324
    %v326 = vmul.f32 %v295, 0.03125
    %v327 = vmul.f32 %v297, 0.03125
    %v328 = vmul.f32 %v299, 0.03125
    %v329 = vmul.f32 %v301, 0.03125
    %v330 = vmul.f32 %v303, 0.03125
    %v331 = vmul.f32 %v305, 0.03125
    %v332 = vmul.f32 %v307, 0.03125
    %v333 = vmul.f32 %v309, 0.03125
    %v334 = vmul.f32 %v311, 0.03125
    %v335 = vmul.f32 %v313, 0.03125
    %v336 = vmul.f32 %v315, 0.03125
    %v337 = vmul.f32 %v317, 0.03125
    %v338 = vmul.f32 %v319, 0.03125
    %v339 = vmul.f32 %v321, 0.03125
    %v340 = vmul.f32 %v323, 0.03125
    %v341 = vmul.f32 %v325, 0.03125
    %v342 = vsub.f32 %v216, %v326
    %v343 = vsub.f32 %v221, %v327
    %v344 = vsub.f32 %v226, %v328
    %v345 = vsub.f32 %v231, %v329
    %v346 = vsub.f32 %v236, %v330
    %v347 = vsub.f32 %v241, %v331
    %v348 = vsub.f32 %v246, %v332
    %v349 = vsub.f32 %v251, %v333
    %v350 = vsub.f32 %v256, %v334
    %v351 = vsub.f32 %v261, %v335
    %v352 = vsub.f32 %v266, %v336
    %v353 = vsub.f32 %v271, %v337
    %v354 = vsub.f32 %v276, %v338
    %v355 = vsub.f32 %v281, %v339
    %v356 = vsub.f32 %v286, %v340
    %v357 = vsub.f32 %v291, %v341
    %v358 = vlaneseq
    %v359 = vand.u32 %v358, 127
    %vm360 = vcmp.lt.s32.totalorder %v359, 32
    %v361 = vsel %vm360, 1, 0
    %vm362 = vcmp.eq.s32.totalorder %v361, 1
    %v363 = vsel %vm362, %v342, 0.0
    %v364 = vsel %vm362, %v343, 0.0
    %v365 = vsel %vm362, %v344, 0.0
    %v366 = vsel %vm362, %v345, 0.0
    %v367 = vsel %vm362, %v346, 0.0
    %v368 = vsel %vm362, %v347, 0.0
    %v369 = vsel %vm362, %v348, 0.0
    %v370 = vsel %vm362, %v349, 0.0
    %v371 = vsel %vm362, %v350, 0.0
    %v372 = vsel %vm362, %v351, 0.0
    %v373 = vsel %vm362, %v352, 0.0
    %v374 = vsel %vm362, %v353, 0.0
    %v375 = vsel %vm362, %v354, 0.0
    %v376 = vsel %vm362, %v355, 0.0
    %v377 = vsel %vm362, %v356, 0.0
    %v378 = vsel %vm362, %v357, 0.0
    %v379 = vmul.f32 %v363, %v363
    %v380 = vmul.f32 %v364, %v364
    %v381 = vmul.f32 %v365, %v365
    %v382 = vmul.f32 %v366, %v366
    %v383 = vmul.f32 %v367, %v367
    %v384 = vmul.f32 %v368, %v368
    %v385 = vmul.f32 %v369, %v369
    %v386 = vmul.f32 %v370, %v370
    %v387 = vmul.f32 %v371, %v371
    %v388 = vmul.f32 %v372, %v372
    %v389 = vmul.f32 %v373, %v373
    %v390 = vmul.f32 %v374, %v374
    %v391 = vmul.f32 %v375, %v375
    %v392 = vmul.f32 %v376, %v376
    %v393 = vmul.f32 %v377, %v377
    %v394 = vmul.f32 %v378, %v378
    %395 = vadd.xlane.f32.xlu0 %v379
    %v396 = vpop.xlane.xlu0 %395
    %397 = vadd.xlane.f32.xlu0 %v380
    %v398 = vpop.xlane.xlu0 %397
    %399 = vadd.xlane.f32.xlu0 %v381
    %v400 = vpop.xlane.xlu0 %399
    %401 = vadd.xlane.f32.xlu0 %v382
    %v402 = vpop.xlane.xlu0 %401
    %403 = vadd.xlane.f32.xlu0 %v383
    %v404 = vpop.xlane.xlu0 %403
    %405 = vadd.xlane.f32.xlu0 %v384
    %v406 = vpop.xlane.xlu0 %405
    %407 = vadd.xlane.f32.xlu0 %v385
    %v408 = vpop.xlane.xlu0 %407
    %409 = vadd.xlane.f32.xlu0 %v386
    %v410 = vpop.xlane.xlu0 %409
    %411 = vadd.xlane.f32.xlu0 %v387
    %v412 = vpop.xlane.xlu0 %411
    %413 = vadd.xlane.f32.xlu0 %v388
    %v414 = vpop.xlane.xlu0 %413
    %415 = vadd.xlane.f32.xlu0 %v389
    %v416 = vpop.xlane.xlu0 %415
    %417 = vadd.xlane.f32.xlu0 %v390
    %v418 = vpop.xlane.xlu0 %417
    %419 = vadd.xlane.f32.xlu0 %v391
    %v420 = vpop.xlane.xlu0 %419
    %421 = vadd.xlane.f32.xlu0 %v392
    %v422 = vpop.xlane.xlu0 %421
    %423 = vadd.xlane.f32.xlu0 %v393
    %v424 = vpop.xlane.xlu0 %423
    %425 = vadd.xlane.f32.xlu0 %v394
    %v426 = vpop.xlane.xlu0 %425
    %v427 = vmul.f32 %v396, 0.03125
    %v428 = vmul.f32 %v398, 0.03125
    %v429 = vmul.f32 %v400, 0.03125
    %v430 = vmul.f32 %v402, 0.03125
    %v431 = vmul.f32 %v404, 0.03125
    %v432 = vmul.f32 %v406, 0.03125
    %v433 = vmul.f32 %v408, 0.03125
    %v434 = vmul.f32 %v410, 0.03125
    %v435 = vmul.f32 %v412, 0.03125
    %v436 = vmul.f32 %v414, 0.03125
    %v437 = vmul.f32 %v416, 0.03125
    %v438 = vmul.f32 %v418, 0.03125
    %v439 = vmul.f32 %v420, 0.03125
    %v440 = vmul.f32 %v422, 0.03125
    %v441 = vmul.f32 %v424, 0.03125
    %v442 = vmul.f32 %v426, 0.03125
    %v443 = vadd.f32 %v427, 1e-05
    %v444 = vadd.f32 %v428, 1e-05
    %v445 = vadd.f32 %v429, 1e-05
    %v446 = vadd.f32 %v430, 1e-05
    %v447 = vadd.f32 %v431, 1e-05
    %v448 = vadd.f32 %v432, 1e-05
    %v449 = vadd.f32 %v433, 1e-05
    %v450 = vadd.f32 %v434, 1e-05
    %v451 = vadd.f32 %v435, 1e-05
    %v452 = vadd.f32 %v436, 1e-05
    %v453 = vadd.f32 %v437, 1e-05
    %v454 = vadd.f32 %v438, 1e-05
    %v455 = vadd.f32 %v439, 1e-05
    %v456 = vadd.f32 %v440, 1e-05
    %v457 = vadd.f32 %v441, 1e-05
    %v458 = vadd.f32 %v442, 1e-05
    %v459 = vrsqrt.pop %v443
    %v460 = vrsqrt.pop %v444
    %v461 = vrsqrt.pop %v445
    %v462 = vrsqrt.pop %v446
    %v463 = vrsqrt.pop %v447
    %v464 = vrsqrt.pop %v448
    %v465 = vrsqrt.pop %v449
    %v466 = vrsqrt.pop %v450
    %v467 = vrsqrt.pop %v451
    %v468 = vrsqrt.pop %v452
    %v469 = vrsqrt.pop %v453
    %v470 = vrsqrt.pop %v454
    %v471 = vrsqrt.pop %v455
    %v472 = vrsqrt.pop %v456
    %v473 = vrsqrt.pop %v457
    %v474 = vrsqrt.pop %v458
    %v475 = vmul.f32 %v363, %v459
    %v476 = vmul.f32 %v364, %v460
    %v477 = vmul.f32 %v365, %v461
    %v478 = vmul.f32 %v366, %v462
    %v479 = vmul.f32 %v367, %v463
    %v480 = vmul.f32 %v368, %v464
    %v481 = vmul.f32 %v369, %v465
    %v482 = vmul.f32 %v370, %v466
    %v483 = vmul.f32 %v371, %v467
    %v484 = vmul.f32 %v372, %v468
    %v485 = vmul.f32 %v373, %v469
    %v486 = vmul.f32 %v374, %v470
    %v487 = vmul.f32 %v375, %v471
    %v488 = vmul.f32 %v376, %v472
    %v489 = vmul.f32 %v377, %v473
    %v490 = vmul.f32 %v378, %v474
    %v491 = vlaneseq
    %v492 = vshrl.u32 %v491, 7
    %v493 = vsub.s32 1, %v492
    %v494 = vrot.slane %v69, %v493
    %v495 = vmul.f32 %v475, %v494
    %v496 = vmul.f32 %v476, %v494
    %v497 = vmul.f32 %v477, %v494
    %v498 = vmul.f32 %v478, %v494
    %v499 = vmul.f32 %v479, %v494
    %v500 = vmul.f32 %v480, %v494
    %v501 = vmul.f32 %v481, %v494
    %v502 = vmul.f32 %v482, %v494
    %v503 = vmul.f32 %v483, %v494
    %v504 = vmul.f32 %v484, %v494
    %v505 = vmul.f32 %v485, %v494
    %v506 = vmul.f32 %v486, %v494
    %v507 = vmul.f32 %v487, %v494
    %v508 = vmul.f32 %v488, %v494
    %v509 = vmul.f32 %v489, %v494
    %v510 = vmul.f32 %v490, %v494
    %v511 = vlaneseq
    %v512 = vshrl.u32 %v511, 7
    %v513 = vsub.s32 2, %v512
    %v514 = vrot.slane %v69, %v513
    %v515 = vadd.f32 %v495, %v514
    %v516 = vadd.f32 %v496, %v514
    %v517 = vadd.f32 %v497, %v514
    %v518 = vadd.f32 %v498, %v514
    %v519 = vadd.f32 %v499, %v514
    %v520 = vadd.f32 %v500, %v514
    %v521 = vadd.f32 %v501, %v514
    %v522 = vadd.f32 %v502, %v514
    %v523 = vadd.f32 %v503, %v514
    %v524 = vadd.f32 %v504, %v514
    %v525 = vadd.f32 %v505, %v514
    %v526 = vadd.f32 %v506, %v514
    %v527 = vadd.f32 %v507, %v514
    %v528 = vadd.f32 %v508, %v514
    %v529 = vadd.f32 %v509, %v514
    %v530 = vadd.f32 %v510, %v514
    %v531 = vtanh.pop %v515
    %v532 = vtanh.pop %v516
    %v533 = vtanh.pop %v517
    %v534 = vtanh.pop %v518
    %v535 = vtanh.pop %v519
    %v536 = vtanh.pop %v520
    %v537 = vtanh.pop %v521
    %v538 = vtanh.pop %v522
    %v539 = vtanh.pop %v523
    %v540 = vtanh.pop %v524
    %v541 = vtanh.pop %v525
    %v542 = vtanh.pop %v526
    %v543 = vtanh.pop %v527
    %v544 = vtanh.pop %v528
    %v545 = vtanh.pop %v529
    %v546 = vtanh.pop %v530
    %v547 = vld [vmem:[%s3] sm:$0xff]
    %v548 = vld [vmem:[%s3 + $0x8] sm:$0xff]
    %v549 = vld [vmem:[%s3 + $0x10] sm:$0xff]
    %v550 = vld [vmem:[%s3 + $0x18] sm:$0xff]
    %v551 = vld [vmem:[%s3 + $0x20] sm:$0xff]
    %v552 = vld [vmem:[%s3 + $0x28] sm:$0xff]
    %v553 = vld [vmem:[%s3 + $0x30] sm:$0xff]
    %v554 = vld [vmem:[%s3 + $0x38] sm:$0xff]
    %v555 = vld [vmem:[%s3 + $0x40] sm:$0xff]
    %v556 = vld [vmem:[%s3 + $0x48] sm:$0xff]
    %v557 = vld [vmem:[%s3 + $0x50] sm:$0xff]
    %v558 = vld [vmem:[%s3 + $0x58] sm:$0xff]
    %v559 = vld [vmem:[%s3 + $0x60] sm:$0xff]
    %v560 = vld [vmem:[%s3 + $0x68] sm:$0xff]
    %v561 = vld [vmem:[%s3 + $0x70] sm:$0xff]
    %v562 = vld [vmem:[%s3 + $0x78] sm:$0xff]
    %v563 = vlaneseq
    %v564 = vshrl.u32 %v563, 7
    %v565 = vsub.s32 3, %v564
    %v566 = vrot.slane %v69, %v565
    %567 = vmatprep.subr.mxu0 0.0
    %568 = vmatpush1.msra.mxu0 %v547
    %569 = vmatprep.subr.mxu0 0.0
    %570 = vmatpush1.msra.mxu0 %v548
    %571 = vmatprep.subr.mxu0 0.0
    %572 = vmatpush1.msra.mxu0 %v549
    %573 = vmatprep.subr.mxu0 0.0
    %574 = vmatpush1.msra.mxu0 %v550
    %575 = vmatprep.subr.mxu0 0.0
    %576 = vmatpush1.msra.mxu0 %v551
    %577 = vmatprep.subr.mxu0 0.0
    %578 = vmatpush1.msra.mxu0 %v552
    %579 = vmatprep.subr.mxu0 0.0
    %580 = vmatpush1.msra.mxu0 %v553
    %581 = vmatprep.subr.mxu0 0.0
    %582 = vmatpush1.msra.mxu0 %v554
    %583 = vmatprep.subr.mxu0 0.0
    %584 = vmatpush1.msra.mxu0 %v555
    %585 = vmatprep.subr.mxu0 0.0
    %586 = vmatpush1.msra.mxu0 %v556
    %587 = vmatprep.subr.mxu0 0.0
    %588 = vmatpush1.msra.mxu0 %v557
    %589 = vmatprep.subr.mxu0 0.0
    %590 = vmatpush1.msra.mxu0 %v558
    %591 = vmatprep.subr.mxu0 0.0
    %592 = vmatpush1.msra.mxu0 %v559
    %593 = vmatprep.subr.mxu0 0.0
    %594 = vmatpush1.msra.mxu0 %v560
    %595 = vmatprep.subr.mxu0 0.0
    %596 = vmatpush1.msra.mxu0 %v561
    %597 = vmatprep.subr.mxu0 0.0
    %598 = vmatpush1.msra.mxu0 %v562
    %599 = vmatprep.subr.mxu0 0.0
    %600 = vmatpush1.msra.mxu0 0.0
    %601 = vmatprep.subr.mxu0 0.0
    %602 = vmatpush1.msra.mxu0 0.0
    %603 = vmatprep.subr.mxu0 0.0
    %604 = vmatpush1.msra.mxu0 0.0
    %605 = vmatprep.subr.mxu0 0.0
    %606 = vmatpush1.msra.mxu0 0.0
    %607 = vmatprep.subr.mxu0 0.0
    %608 = vmatpush1.msra.mxu0 0.0
    %609 = vmatprep.subr.mxu0 0.0
    %610 = vmatpush1.msra.mxu0 0.0
    %611 = vmatprep.subr.mxu0 0.0
    %612 = vmatpush1.msra.mxu0 0.0
    %613 = vmatprep.subr.mxu0 0.0
    %614 = vmatpush1.msra.mxu0 0.0
    %615 = vmatprep.subr.mxu0 0.0
    %616 = vmatpush1.msra.mxu0 0.0
    %617 = vmatprep.subr.mxu0 0.0
    %618 = vmatpush1.msra.mxu0 0.0
    %619 = vmatprep.subr.mxu0 0.0
    %620 = vmatpush1.msra.mxu0 0.0
    %621 = vmatprep.subr.mxu0 0.0
    %622 = vmatpush1.msra.mxu0 0.0
    %623 = vmatprep.subr.mxu0 0.0
    %624 = vmatpush1.msra.mxu0 0.0
    %625 = vmatprep.subr.mxu0 0.0
    %626 = vmatpush1.msra.mxu0 0.0
    %627 = vmatprep.subr.mxu0 0.0
    %628 = vmatpush1.msra.mxu0 0.0
    %629 = vmatprep.subr.mxu0 0.0
    %630 = vmatpush1.msra.mxu0 0.0
    %631 = vmatprep.mubr.f32.mxu0 0.0
    %632 = vmatmul.mubr.f32.gmra.mrb[0].mxu0 %v531
    %v633 = vpop.f32.mrb[0].mxu0
    %v634 = vadd.f32 %v566, %v633
    %v635 = vpop.f32.mrb[0].mxu0
    %636 = vmatprep.mubr.f32.mxu0 0.0
    %637 = vmatmul.mubr.f32.gmra.mrb[0].mxu0 %v532
    %v638 = vpop.f32.mrb[0].mxu0
    %v639 = vadd.f32 %v566, %v638
    %v640 = vpop.f32.mrb[0].mxu0
    %641 = vmatprep.mubr.f32.mxu0 0.0
    %642 = vmatmul.mubr.f32.gmra.mrb[0].mxu0 %v533
    %v643 = vpop.f32.mrb[0].mxu0
    %v644 = vadd.f32 %v566, %v643
    %v645 = vpop.f32.mrb[0].mxu0
    %646 = vmatprep.mubr.f32.mxu0 0.0
    %647 = vmatmul.mubr.f32.gmra.mrb[0].mxu0 %v534
    %v648 = vpop.f32.mrb[0].mxu0
    %v649 = vadd.f32 %v566, %v648
    %v650 = vpop.f32.mrb[0].mxu0
    %651 = vmatprep.mubr.f32.mxu0 0.0
    %652 = vmatmul.mubr.f32.gmra.mrb[0].mxu0 %v535
    %v653 = vpop.f32.mrb[0].mxu0
    %v654 = vadd.f32 %v566, %v653
    %v655 = vpop.f32.mrb[0].mxu0
    %656 = vmatprep.mubr.f32.mxu0 0.0
    %657 = vmatmul.mubr.f32.gmra.mrb[0].mxu0 %v536
    %v658 = vpop.f32.mrb[0].mxu0
    %v659 = vadd.f32 %v566, %v658
    %v660 = vpop.f32.mrb[0].mxu0
    %661 = vmatprep.mubr.f32.mxu0 0.0
    %662 = vmatmul.mubr.f32.gmra.mrb[0].mxu0 %v537
    %v663 = vpop.f32.mrb[0].mxu0
    %v664 = vadd.f32 %v566, %v663
    %v665 = vpop.f32.mrb[0].mxu0
    %666 = vmatprep.mubr.f32.mxu0 0.0
    %667 = vmatmul.mubr.f32.gmra.mrb[0].mxu0 %v538
    %v668 = vpop.f32.mrb[0].mxu0
    %v669 = vadd.f32 %v566, %v668
    %v670 = vpop.f32.mrb[0].mxu0
    %671 = vmatprep.mubr.f32.mxu0 0.0
    %672 = vmatmul.mubr.f32.gmra.mrb[0].mxu0 %v539
    %v673 = vpop.f32.mrb[0].mxu0
    %v674 = vadd.f32 %v566, %v673
    %v675 = vpop.f32.mrb[0].mxu0
    %676 = vmatprep.mubr.f32.mxu0 0.0
    %677 = vmatmul.mubr.f32.gmra.mrb[0].mxu0 %v540
    %v678 = vpop.f32.mrb[0].mxu0
    %v679 = vadd.f32 %v566, %v678
    %v680 = vpop.f32.mrb[0].mxu0
    %681 = vmatprep.mubr.f32.mxu0 0.0
    %682 = vmatmul.mubr.f32.gmra.mrb[0].mxu0 %v541
    %v683 = vpop.f32.mrb[0].mxu0
    %v684 = vadd.f32 %v566, %v683
    %v685 = vpop.f32.mrb[0].mxu0
    %686 = vmatprep.mubr.f32.mxu0 0.0
    %687 = vmatmul.mubr.f32.gmra.mrb[0].mxu0 %v542
    %v688 = vpop.f32.mrb[0].mxu0
    %v689 = vadd.f32 %v566, %v688
    %v690 = vpop.f32.mrb[0].mxu0
    %691 = vmatprep.mubr.f32.mxu0 0.0
    %692 = vmatmul.mubr.f32.gmra.mrb[0].mxu0 %v543
    %v693 = vpop.f32.mrb[0].mxu0
    %v694 = vadd.f32 %v566, %v693
    %v695 = vpop.f32.mrb[0].mxu0
    %696 = vmatprep.mubr.f32.mxu0 0.0
    %697 = vmatmul.mubr.f32.gmra.mrb[0].mxu0 %v544
    %v698 = vpop.f32.mrb[0].mxu0
    %v699 = vadd.f32 %v566, %v698
    %v700 = vpop.f32.mrb[0].mxu0
    %701 = vmatprep.mubr.f32.mxu0 0.0
    %702 = vmatmul.mubr.f32.gmra.mrb[0].mxu0 %v545
    %v703 = vpop.f32.mrb[0].mxu0
    %v704 = vadd.f32 %v566, %v703
    %v705 = vpop.f32.mrb[0].mxu0
    %706 = vmatprep.mubr.f32.mxu0 0.0
    %707 = vmatmul.mubr.f32.gmra.mrb[0].mxu0 %v546
    %v708 = vpop.f32.mrb[0].mxu0
    %v709 = vadd.f32 %v566, %v708
    %v710 = vpop.f32.mrb[0].mxu0
    %711 = vdwg.mxu0
    %v712 = vmax.f32 %v634, 0.0
    %v713 = vmax.f32 %v639, 0.0
    %v714 = vmax.f32 %v644, 0.0
    %v715 = vmax.f32 %v649, 0.0
    %v716 = vmax.f32 %v654, 0.0
    %v717 = vmax.f32 %v659, 0.0
    %v718 = vmax.f32 %v664, 0.0
    %v719 = vmax.f32 %v669, 0.0
    %v720 = vmax.f32 %v674, 0.0
    %v721 = vmax.f32 %v679, 0.0
    %v722 = vmax.f32 %v684, 0.0
    %v723 = vmax.f32 %v689, 0.0
    %v724 = vmax.f32 %v694, 0.0
    %v725 = vmax.f32 %v699, 0.0
    %v726 = vmax.f32 %v704, 0.0
    %v727 = vmax.f32 %v709, 0.0
    %v728 = vld [vmem:[#allocation2] sm:$0xff]
    %v729 = vld [vmem:[#allocation2 + $0x8] sm:$0xff]
    %v730 = vld [vmem:[#allocation2 + $0x10] sm:$0xff]
    %v731 = vld [vmem:[#allocation2 + $0x18] sm:$0xff]
    %v732 = vld [vmem:[#allocation2 + $0x20] sm:$0xff]
    %v733 = vld [vmem:[#allocation2 + $0x28] sm:$0xff]
    %v734 = vld [vmem:[#allocation2 + $0x30] sm:$0xff]
    %v735 = vld [vmem:[#allocation2 + $0x38] sm:$0xff]
    %v736 = vld [vmem:[#allocation2 + $0x40] sm:$0xff]
    %v737 = vld [vmem:[#allocation2 + $0x48] sm:$0xff]
    %v738 = vld [vmem:[#allocation2 + $0x50] sm:$0xff]
    %v739 = vld [vmem:[#allocation2 + $0x58] sm:$0xff]
    %v740 = vld [vmem:[#allocation2 + $0x60] sm:$0xff]
    %v741 = vld [vmem:[#allocation2 + $0x68] sm:$0xff]
    %v742 = vld [vmem:[#allocation2 + $0x70] sm:$0xff]
    %v743 = vld [vmem:[#allocation2 + $0x78] sm:$0xff]
    %v744 = vlaneseq
    %v745 = vshrl.u32 %v744, 7
    %v746 = vsub.s32 4, %v745
    %v747 = vrot.slane %v69, %v746
    %748 = vmatprep.subr.mxu0 0.0
    %749 = vmatpush1.msra.mxu0 %v728
    %750 = vmatprep.subr.mxu0 0.0
    %751 = vmatpush1.msra.mxu0 %v729
    %752 = vmatprep.subr.mxu0 0.0
    %753 = vmatpush1.msra.mxu0 %v730
    %754 = vmatprep.subr.mxu0 0.0
    %755 = vmatpush1.msra.mxu0 %v731
    %756 = vmatprep.subr.mxu0 0.0
    %757 = vmatpush1.msra.mxu0 %v732
    %758 = vmatprep.subr.mxu0 0.0
    %759 = vmatpush1.msra.mxu0 %v733
    %760 = vmatprep.subr.mxu0 0.0
    %761 = vmatpush1.msra.mxu0 %v734
    %762 = vmatprep.subr.mxu0 0.0
    %763 = vmatpush1.msra.mxu0 %v735
    %764 = vmatprep.subr.mxu0 0.0
    %765 = vmatpush1.msra.mxu0 %v736
    %766 = vmatprep.subr.mxu0 0.0
    %767 = vmatpush1.msra.mxu0 %v737
    %768 = vmatprep.subr.mxu0 0.0
    %769 = vmatpush1.msra.mxu0 %v738
    %770 = vmatprep.subr.mxu0 0.0
    %771 = vmatpush1.msra.mxu0 %v739
    %772 = vmatprep.subr.mxu0 0.0
    %773 = vmatpush1.msra.mxu0 %v740
    %774 = vmatprep.subr.mxu0 0.0
    %775 = vmatpush1.msra.mxu0 %v741
    %776 = vmatprep.subr.mxu0 0.0
    %777 = vmatpush1.msra.mxu0 %v742
    %778 = vmatprep.subr.mxu0 0.0
    %779 = vmatpush1.msra.mxu0 %v743
    %780 = vmatprep.subr.mxu0 0.0
    %781 = vmatpush1.msra.mxu0 0.0
    %782 = vmatprep.subr.mxu0 0.0
    %783 = vmatpush1.msra.mxu0 0.0
    %784 = vmatprep.subr.mxu0 0.0
    %785 = vmatpush1.msra.mxu0 0.0
    %786 = vmatprep.subr.mxu0 0.0
    %787 = vmatpush1.msra.mxu0 0.0
    %788 = vmatprep.subr.mxu0 0.0
    %789 = vmatpush1.msra.mxu0 0.0
    %790 = vmatprep.subr.mxu0 0.0
    %791 = vmatpush1.msra.mxu0 0.0
    %792 = vmatprep.subr.mxu0 0.0
    %793 = vmatpush1.msra.mxu0 0.0
    %794 = vmatprep.subr.mxu0 0.0
    %795 = vmatpush1.msra.mxu0 0.0
    %796 = vmatprep.subr.mxu0 0.0
    %797 = vmatpush1.msra.mxu0 0.0
    %798 = vmatprep.subr.mxu0 0.0
    %799 = vmatpush1.msra.mxu0 0.0
    %800 = vmatprep.subr.mxu0 0.0
    %801 = vmatpush1.msra.mxu0 0.0
    %802 = vmatprep.subr.mxu0 0.0
    %803 = vmatpush1.msra.mxu0 0.0
    %804 = vmatprep.subr.mxu0 0.0
    %805 = vmatpush1.msra.mxu0 0.0
    %806 = vmatprep.subr.mxu0 0.0
    %807 = vmatpush1.msra.mxu0 0.0
    %808 = vmatprep.subr.mxu0 0.0
    %809 = vmatpush1.msra.mxu0 0.0
    %810 = vmatprep.subr.mxu0 0.0
    %811 = vmatpush1.msra.mxu0 0.0
    %812 = vmatprep.mubr.f32.mxu0 0.0
    %813 = vmatmul.mubr.f32.gmra.mrb[0].mxu0 %v712
    %v814 = vpop.f32.mrb[0].mxu0
    %v815 = vadd.f32 %v747, %v814
    %v816 = vpop.f32.mrb[0].mxu0
    %817 = vmatprep.mubr.f32.mxu0 0.0
    %818 = vmatmul.mubr.f32.gmra.mrb[0].mxu0 %v713
    %v819 = vpop.f32.mrb[0].mxu0
    %v820 = vadd.f32 %v747, %v819
    %v821 = vpop.f32.mrb[0].mxu0
    %822 = vmatprep.mubr.f32.mxu0 0.0
    %823 = vmatmul.mubr.f32.gmra.mrb[0].mxu0 %v714
    %v824 = vpop.f32.mrb[0].mxu0
    %v825 = vadd.f32 %v747, %v824
    %v826 = vpop.f32.mrb[0].mxu0
    %827 = vmatprep.mubr.f32.mxu0 0.0
    %828 = vmatmul.mubr.f32.gmra.mrb[0].mxu0 %v715
    %v829 = vpop.f32.mrb[0].mxu0
    %v830 = vadd.f32 %v747, %v829
    %v831 = vpop.f32.mrb[0].mxu0
    %832 = vmatprep.mubr.f32.mxu0 0.0
    %833 = vmatmul.mubr.f32.gmra.mrb[0].mxu0 %v716
    %v834 = vpop.f32.mrb[0].mxu0
    %v835 = vadd.f32 %v747, %v834
    %v836 = vpop.f32.mrb[0].mxu0
    %837 = vmatprep.mubr.f32.mxu0 0.0
    %838 = vmatmul.mubr.f32.gmra.mrb[0].mxu0 %v717
    %v839 = vpop.f32.mrb[0].mxu0
    %v840 = vadd.f32 %v747, %v839
    %v841 = vpop.f32.mrb[0].mxu0
    %842 = vmatprep.mubr.f32.mxu0 0.0
    %843 = vmatmul.mubr.f32.gmra.mrb[0].mxu0 %v718
    %v844 = vpop.f32.mrb[0].mxu0
    %v845 = vadd.f32 %v747, %v844
    %v846 = vpop.f32.mrb[0].mxu0
    %847 = vmatprep.mubr.f32.mxu0 0.0
    %848 = vmatmul.mubr.f32.gmra.mrb[0].mxu0 %v719
    %v849 = vpop.f32.mrb[0].mxu0
    %v850 = vadd.f32 %v747, %v849
    %v851 = vpop.f32.mrb[0].mxu0
    %852 = vmatprep.mubr.f32.mxu0 0.0
    %853 = vmatmul.mubr.f32.gmra.mrb[0].mxu0 %v720
    %v854 = vpop.f32.mrb[0].mxu0
    %v855 = vadd.f32 %v747, %v854
    %v856 = vpop.f32.mrb[0].mxu0
    %857 = vmatprep.mubr.f32.mxu0 0.0
    %858 = vmatmul.mubr.f32.gmra.mrb[0].mxu0 %v721
    %v859 = vpop.f32.mrb[0].mxu0
    %v860 = vadd.f32 %v747, %v859
    %v861 = vpop.f32.mrb[0].mxu0
    %862 = vmatprep.mubr.f32.mxu0 0.0
    %863 = vmatmul.mubr.f32.gmra.mrb[0].mxu0 %v722
    %v864 = vpop.f32.mrb[0].mxu0
    %v865 = vadd.f32 %v747, %v864
    %v866 = vpop.f32.mrb[0].mxu0
    %867 = vmatprep.mubr.f32.mxu0 0.0
    %868 = vmatmul.mubr.f32.gmra.mrb[0].mxu0 %v723
    %v869 = vpop.f32.mrb[0].mxu0
    %v870 = vadd.f32 %v747, %v869
    %v871 = vpop.f32.mrb[0].mxu0
    %872 = vmatprep.mubr.f32.mxu0 0.0
    %873 = vmatmul.mubr.f32.gmra.mrb[0].mxu0 %v724
    %v874 = vpop.f32.mrb[0].mxu0
    %v875 = vadd.f32 %v747, %v874
    %v876 = vpop.f32.mrb[0].mxu0
    %877 = vmatprep.mubr.f32.mxu0 0.0
    %878 = vmatmul.mubr.f32.gmra.mrb[0].mxu0 %v725
    %v879 = vpop.f32.mrb[0].mxu0
    %v880 = vadd.f32 %v747, %v879
    %v881 = vpop.f32.mrb[0].mxu0
    %882 = vmatprep.mubr.f32.mxu0 0.0
    %883 = vmatmul.mubr.f32.gmra.mrb[0].mxu0 %v726
    %v884 = vpop.f32.mrb[0].mxu0
    %v885 = vadd.f32 %v747, %v884
    %v886 = vpop.f32.mrb[0].mxu0
    %887 = vmatprep.mubr.f32.mxu0 0.0
    %888 = vmatmul.mubr.f32.gmra.mrb[0].mxu0 %v727
    %v889 = vpop.f32.mrb[0].mxu0
    %v890 = vadd.f32 %v747, %v889
    %v891 = vpop.f32.mrb[0].mxu0
    %892 = vdwg.mxu0
    %v893 = vmax.f32 %v815, 0.0
    %v894 = vmax.f32 %v820, 0.0
    %v895 = vmax.f32 %v825, 0.0
    %v896 = vmax.f32 %v830, 0.0
    %v897 = vmax.f32 %v835, 0.0
    %v898 = vmax.f32 %v840, 0.0
    %v899 = vmax.f32 %v845, 0.0
    %v900 = vmax.f32 %v850, 0.0
    %v901 = vmax.f32 %v855, 0.0
    %v902 = vmax.f32 %v860, 0.0
    %v903 = vmax.f32 %v865, 0.0
    %v904 = vmax.f32 %v870, 0.0
    %v905 = vmax.f32 %v875, 0.0
    %v906 = vmax.f32 %v880, 0.0
    %v907 = vmax.f32 %v885, 0.0
    %v908 = vmax.f32 %v890, 0.0
    %v909 = vld [vmem:[#allocation5] sm:$0xff]
    %v910 = vld [vmem:[#allocation5 + $0x8] sm:$0xff]
    %v911 = vld [vmem:[#allocation5 + $0x10] sm:$0xff]
    %v912 = vld [vmem:[#allocation5 + $0x18] sm:$0xff]
    %v913 = vld [vmem:[#allocation5 + $0x20] sm:$0xff]
    %v914 = vld [vmem:[#allocation5 + $0x28] sm:$0xff]
    %v915 = vld [vmem:[#allocation5 + $0x30] sm:$0xff]
    %v916 = vld [vmem:[#allocation5 + $0x38] sm:$0xff]
    %v917 = vld [vmem:[#allocation5 + $0x40] sm:$0xff]
    %v918 = vld [vmem:[#allocation5 + $0x48] sm:$0xff]
    %v919 = vld [vmem:[#allocation5 + $0x50] sm:$0xff]
    %v920 = vld [vmem:[#allocation5 + $0x58] sm:$0xff]
    %v921 = vld [vmem:[#allocation5 + $0x60] sm:$0xff]
    %v922 = vld [vmem:[#allocation5 + $0x68] sm:$0xff]
    %v923 = vld [vmem:[#allocation5 + $0x70] sm:$0xff]
    %v924 = vld [vmem:[#allocation5 + $0x78] sm:$0xff]
    %v925 = vld [vmem:[#allocation5 + $0x80] sm:$0xff]
    %v926 = vld [vmem:[#allocation5 + $0x88] sm:$0xff]
    %v927 = vld [vmem:[#allocation5 + $0x90] sm:$0xff]
    %v928 = vld [vmem:[#allocation5 + $0x98] sm:$0xff]
    %v929 = vld [vmem:[#allocation5 + $0xa0] sm:$0xff]
    %v930 = vld [vmem:[#allocation5 + $0xa8] sm:$0xff]
    %v931 = vld [vmem:[#allocation5 + $0xb0] sm:$0xff]
    %v932 = vld [vmem:[#allocation5 + $0xb8] sm:$0xff]
    %v933 = vld [vmem:[#allocation5 + $0xc0] sm:$0xff]
    %v934 = vld [vmem:[#allocation5 + $0xc8] sm:$0xff]
    %v935 = vld [vmem:[#allocation5 + $0xd0] sm:$0xff]
    %v936 = vld [vmem:[#allocation5 + $0xd8] sm:$0xff]
    %v937 = vld [vmem:[#allocation5 + $0xe0] sm:$0xff]
    %v938 = vld [vmem:[#allocation5 + $0xe8] sm:$0xff]
    %v939 = vld [vmem:[#allocation5 + $0xf0] sm:$0xff]
    %v940 = vld [vmem:[#allocation5 + $0xf8] sm:$0xff]
    %v941 = vlaneseq
    %v942 = vshrl.u32 %v941, 7
    %v943 = vsub.s32 5, %v942
    %v944 = vrot.slane %v69, %v943
    %v945 = vlaneseq
    %v946 = vshrl.u32 %v945, 7
    %v947 = vsub.s32 5, %v946
    %v948 = vrot.slane %v70, %v947
    %949 = vmatprep.subr.mxu0 %v910
    %950 = vmatpush1.msra.mxu0 %v909
    %951 = vmatprep.subr.mxu0 %v912
    %952 = vmatpush1.msra.mxu0 %v911
    %953 = vmatprep.subr.mxu0 %v914
    %954 = vmatpush1.msra.mxu0 %v913
    %955 = vmatprep.subr.mxu0 %v916
    %956 = vmatpush1.msra.mxu0 %v915
    %957 = vmatprep.subr.mxu0 %v918
    %958 = vmatpush1.msra.mxu0 %v917
    %959 = vmatprep.subr.mxu0 %v920
    %960 = vmatpush1.msra.mxu0 %v919
    %961 = vmatprep.subr.mxu0 %v922
    %962 = vmatpush1.msra.mxu0 %v921
    %963 = vmatprep.subr.mxu0 %v924
    %964 = vmatpush1.msra.mxu0 %v923
    %965 = vmatprep.subr.mxu0 %v926
    %966 = vmatpush1.msra.mxu0 %v925
    %967 = vmatprep.subr.mxu0 %v928
    %968 = vmatpush1.msra.mxu0 %v927
    %969 = vmatprep.subr.mxu0 %v930
    %970 = vmatpush1.msra.mxu0 %v929
    %971 = vmatprep.subr.mxu0 %v932
    %972 = vmatpush1.msra.mxu0 %v931
    %973 = vmatprep.subr.mxu0 %v934
    %974 = vmatpush1.msra.mxu0 %v933
    %975 = vmatprep.subr.mxu0 %v936
    %976 = vmatpush1.msra.mxu0 %v935
    %977 = vmatprep.subr.mxu0 %v938
    %978 = vmatpush1.msra.mxu0 %v937
    %979 = vmatprep.subr.mxu0 %v940
    %980 = vmatpush1.msra.mxu0 %v939
    %981 = vmatprep.subr.mxu0 0.0
    %982 = vmatpush1.msra.mxu0 0.0
    %983 = vmatprep.subr.mxu0 0.0
    %984 = vmatpush1.msra.mxu0 0.0
    %985 = vmatprep.subr.mxu0 0.0
    %986 = vmatpush1.msra.mxu0 0.0
    %987 = vmatprep.subr.mxu0 0.0
    %988 = vmatpush1.msra.mxu0 0.0
    %989 = vmatprep.subr.mxu0 0.0
    %990 = vmatpush1.msra.mxu0 0.0
    %991 = vmatprep.subr.mxu0 0.0
    %992 = vmatpush1.msra.mxu0 0.0
    %993 = vmatprep.subr.mxu0 0.0
    %994 = vmatpush1.msra.mxu0 0.0
    %995 = vmatprep.subr.mxu0 0.0
    %996 = vmatpush1.msra.mxu0 0.0
    %997 = vmatprep.subr.mxu0 0.0
    %998 = vmatpush1.msra.mxu0 0.0
    %999 = vmatprep.subr.mxu0 0.0
    %1000 = vmatpush1.msra.mxu0 0.0
    %1001 = vmatprep.subr.mxu0 0.0
    %1002 = vmatpush1.msra.mxu0 0.0
    %1003 = vmatprep.subr.mxu0 0.0
    %1004 = vmatpush1.msra.mxu0 0.0
    %1005 = vmatprep.subr.mxu0 0.0
    %1006 = vmatpush1.msra.mxu0 0.0
    %1007 = vmatprep.subr.mxu0 0.0
    %1008 = vmatpush1.msra.mxu0 0.0
    %1009 = vmatprep.subr.mxu0 0.0
    %1010 = vmatpush1.msra.mxu0 0.0
    %1011 = vmatprep.subr.mxu0 0.0
    %1012 = vmatpush1.msra.mxu0 0.0
    %1013 = vmatprep.mubr.f32.mxu0 0.0
    %1014 = vmatmul.mubr.f32.gmra.mrb[0].mxu0 %v893
    %v1015 = vpop.f32.mrb[0].mxu0
    %v1016 = vadd.f32 %v944, %v1015
    %v1017 = vpop.f32.mrb[0].mxu0
    %v1018 = vadd.f32 %v948, %v1017
    %1019 = vmatprep.mubr.f32.mxu0 0.0
    %1020 = vmatmul.mubr.f32.gmra.mrb[0].mxu0 %v894
    %v1021 = vpop.f32.mrb[0].mxu0
    %v1022 = vadd.f32 %v944, %v1021
    %v1023 = vpop.f32.mrb[0].mxu0
    %v1024 = vadd.f32 %v948, %v1023
    %1025 = vmatprep.mubr.f32.mxu0 0.0
    %1026 = vmatmul.mubr.f32.gmra.mrb[0].mxu0 %v895
    %v1027 = vpop.f32.mrb[0].mxu0
    %v1028 = vadd.f32 %v944, %v1027
    %v1029 = vpop.f32.mrb[0].mxu0
    %v1030 = vadd.f32 %v948, %v1029
    %1031 = vmatprep.mubr.f32.mxu0 0.0
    %1032 = vmatmul.mubr.f32.gmra.mrb[0].mxu0 %v896
    %v1033 = vpop.f32.mrb[0].mxu0
    %v1034 = vadd.f32 %v944, %v1033
    %v1035 = vpop.f32.mrb[0].mxu0
    %v1036 = vadd.f32 %v948, %v1035
    %1037 = vmatprep.mubr.f32.mxu0 0.0
    %1038 = vmatmul.mubr.f32.gmra.mrb[0].mxu0 %v897
    %v1039 = vpop.f32.mrb[0].mxu0
    %v1040 = vadd.f32 %v944, %v1039
    %v1041 = vpop.f32.mrb[0].mxu0
    %v1042 = vadd.f32 %v948, %v1041
    %1043 = vmatprep.mubr.f32.mxu0 0.0
    %1044 = vmatmul.mubr.f32.gmra.mrb[0].mxu0 %v898
    %v1045 = vpop.f32.mrb[0].mxu0
    %v1046 = vadd.f32 %v944, %v1045
    %v1047 = vpop.f32.mrb[0].mxu0
    %v1048 = vadd.f32 %v948, %v1047
    %1049 = vmatprep.mubr.f32.mxu0 0.0
    %1050 = vmatmul.mubr.f32.gmra.mrb[0].mxu0 %v899
    %v1051 = vpop.f32.mrb[0].mxu0
    %v1052 = vadd.f32 %v944, %v1051
    %v1053 = vpop.f32.mrb[0].mxu0
    %v1054 = vadd.f32 %v948, %v1053
    %1055 = vmatprep.mubr.f32.mxu0 0.0
    %1056 = vmatmul.mubr.f32.gmra.mrb[0].mxu0 %v900
    %v1057 = vpop.f32.mrb[0].mxu0
    %v1058 = vadd.f32 %v944, %v1057
    %v1059 = vpop.f32.mrb[0].mxu0
    %v1060 = vadd.f32 %v948, %v1059
    %1061 = vmatprep.mubr.f32.mxu0 0.0
    %1062 = vmatmul.mubr.f32.gmra.mrb[0].mxu0 %v901
    %v1063 = vpop.f32.mrb[0].mxu0
    %v1064 = vadd.f32 %v944, %v1063
    %v1065 = vpop.f32.mrb[0].mxu0
    %v1066 = vadd.f32 %v948, %v1065
    %1067 = vmatprep.mubr.f32.mxu0 0.0
    %1068 = vmatmul.mubr.f32.gmra.mrb[0].mxu0 %v902
    %v1069 = vpop.f32.mrb[0].mxu0
    %v1070 = vadd.f32 %v944, %v1069
    %v1071 = vpop.f32.mrb[0].mxu0
    %v1072 = vadd.f32 %v948, %v1071
    %1073 = vmatprep.mubr.f32.mxu0 0.0
    %1074 = vmatmul.mubr.f32.gmra.mrb[0].mxu0 %v903
    %v1075 = vpop.f32.mrb[0].mxu0
    %v1076 = vadd.f32 %v944, %v1075
    %v1077 = vpop.f32.mrb[0].mxu0
    %v1078 = vadd.f32 %v948, %v1077
    %1079 = vmatprep.mubr.f32.mxu0 0.0
    %1080 = vmatmul.mubr.f32.gmra.mrb[0].mxu0 %v904
    %v1081 = vpop.f32.mrb[0].mxu0
    %v1082 = vadd.f32 %v944, %v1081
    %v1083 = vpop.f32.mrb[0].mxu0
    %v1084 = vadd.f32 %v948, %v1083
    %1085 = vmatprep.mubr.f32.mxu0 0.0
    %1086 = vmatmul.mubr.f32.gmra.mrb[0].mxu0 %v905
    %v1087 = vpop.f32.mrb[0].mxu0
    %v1088 = vadd.f32 %v944, %v1087
    %v1089 = vpop.f32.mrb[0].mxu0
    %v1090 = vadd.f32 %v948, %v1089
    %1091 = vmatprep.mubr.f32.mxu0 0.0
    %1092 = vmatmul.mubr.f32.gmra.mrb[0].mxu0 %v906
    %v1093 = vpop.f32.mrb[0].mxu0
    %v1094 = vadd.f32 %v944, %v1093
    %v1095 = vpop.f32.mrb[0].mxu0
    %v1096 = vadd.f32 %v948, %v1095
    %1097 = vmatprep.mubr.f32.mxu0 0.0
    %1098 = vmatmul.mubr.f32.gmra.mrb[0].mxu0 %v907
    %v1099 = vpop.f32.mrb[0].mxu0
    %v1100 = vadd.f32 %v944, %v1099
    %v1101 = vpop.f32.mrb[0].mxu0
    %v1102 = vadd.f32 %v948, %v1101
    %1103 = vmatprep.mubr.f32.mxu0 0.0
    %1104 = vmatmul.mubr.f32.gmra.mrb[0].mxu0 %v908
    %v1105 = vpop.f32.mrb[0].mxu0
    %v1106 = vadd.f32 %v944, %v1105
    %v1107 = vpop.f32.mrb[0].mxu0
    %v1108 = vadd.f32 %v948, %v1107
    %1109 = vdwg.mxu0
    %v1110 = vmax.f32 %v1016, 0.0
    %v1111 = vmax.f32 %v1018, 0.0
    %v1112 = vmax.f32 %v1022, 0.0
    %v1113 = vmax.f32 %v1024, 0.0
    %v1114 = vmax.f32 %v1028, 0.0
    %v1115 = vmax.f32 %v1030, 0.0
    %v1116 = vmax.f32 %v1034, 0.0
    %v1117 = vmax.f32 %v1036, 0.0
    %v1118 = vmax.f32 %v1040, 0.0
    %v1119 = vmax.f32 %v1042, 0.0
    %v1120 = vmax.f32 %v1046, 0.0
    %v1121 = vmax.f32 %v1048, 0.0
    %v1122 = vmax.f32 %v1052, 0.0
    %v1123 = vmax.f32 %v1054, 0.0
    %v1124 = vmax.f32 %v1058, 0.0
    %v1125 = vmax.f32 %v1060, 0.0
    %v1126 = vmax.f32 %v1064, 0.0
    %v1127 = vmax.f32 %v1066, 0.0
    %v1128 = vmax.f32 %v1070, 0.0
    %v1129 = vmax.f32 %v1072, 0.0
    %v1130 = vmax.f32 %v1076, 0.0
    %v1131 = vmax.f32 %v1078, 0.0
    %v1132 = vmax.f32 %v1082, 0.0
    %v1133 = vmax.f32 %v1084, 0.0
    %v1134 = vmax.f32 %v1088, 0.0
    %v1135 = vmax.f32 %v1090, 0.0
    %v1136 = vmax.f32 %v1094, 0.0
    %v1137 = vmax.f32 %v1096, 0.0
    %v1138 = vmax.f32 %v1100, 0.0
    %v1139 = vmax.f32 %v1102, 0.0
    %v1140 = vmax.f32 %v1106, 0.0
    %v1141 = vmax.f32 %v1108, 0.0
    %v1142 = vld [vmem:[#allocation7] sm:$0xff]
    %v1143 = vld [vmem:[#allocation7 + $0x8] sm:$0xff]
    %v1144 = vld [vmem:[%s7] sm:$0xff]
    %1146 = vset.pattern.permute.xlu0 0
    %1147 = vperm.xlu0 %1146, %v1144
    %v1148 = vpop.permute.xlu0 %1147
    %1150 = vmatprep.subr.mxu0 %v1111
    %1151 = vmatpush1.xpose.msra.mxu0 %v1110
    %1152 = vmatprep.subr.mxu0 %v1113
    %1153 = vmatpush1.xpose.msra.mxu0 %v1112
    %1154 = vmatprep.subr.mxu0 %v1115
    %1155 = vmatpush1.xpose.msra.mxu0 %v1114
    %1156 = vmatprep.subr.mxu0 %v1117
    %1157 = vmatpush1.xpose.msra.mxu0 %v1116
    %1158 = vmatprep.subr.mxu0 %v1119
    %1159 = vmatpush1.xpose.msra.mxu0 %v1118
    %1160 = vmatprep.subr.mxu0 %v1121
    %1161 = vmatpush1.xpose.msra.mxu0 %v1120
    %1162 = vmatprep.subr.mxu0 %v1123
    %1163 = vmatpush1.xpose.msra.mxu0 %v1122
    %1164 = vmatprep.subr.mxu0 %v1125
    %1165 = vmatpush1.xpose.msra.mxu0 %v1124
    %1166 = vmatprep.subr.mxu0 %v1127
    %1167 = vmatpush1.xpose.msra.mxu0 %v1126
    %1168 = vmatprep.subr.mxu0 %v1129
    %1169 = vmatpush1.xpose.msra.mxu0 %v1128
    %1170 = vmatprep.subr.mxu0 %v1131
    %1171 = vmatpush1.xpose.msra.mxu0 %v1130
    %1172 = vmatprep.subr.mxu0 %v1133
    %1173 = vmatpush1.xpose.msra.mxu0 %v1132
    %1174 = vmatprep.subr.mxu0 %v1135
    %1175 = vmatpush1.xpose.msra.mxu0 %v1134
    %1176 = vmatprep.subr.mxu0 %v1137
    %1177 = vmatpush1.xpose.msra.mxu0 %v1136
    %1178 = vmatprep.subr.mxu0 %v1139
    %1179 = vmatpush1.xpose.msra.mxu0 %v1138
    %1180 = vmatprep.subr.mxu0 %v1141
    %1181 = vmatpush1.xpose.msra.mxu0 %v1140
    %1182 = vmatprep.subr.mxu0 0.0
    %1183 = vmatpush1.xpose.msra.mxu0 0.0
    %1184 = vmatprep.subr.mxu0 0.0
    %1185 = vmatpush1.xpose.msra.mxu0 0.0
    %1186 = vmatprep.subr.mxu0 0.0
    %1187 = vmatpush1.xpose.msra.mxu0 0.0
    %1188 = vmatprep.subr.mxu0 0.0
    %1189 = vmatpush1.xpose.msra.mxu0 0.0
    %1190 = vmatprep.subr.mxu0 0.0
    %1191 = vmatpush1.xpose.msra.mxu0 0.0
    %1192 = vmatprep.subr.mxu0 0.0
    %1193 = vmatpush1.xpose.msra.mxu0 0.0
    %1194 = vmatprep.subr.mxu0 0.0
    %1195 = vmatpush1.xpose.msra.mxu0 0.0
    %1196 = vmatprep.subr.mxu0 0.0
    %1197 = vmatpush1.xpose.msra.mxu0 0.0
    %1198 = vmatprep.subr.mxu0 0.0
    %1199 = vmatpush1.xpose.msra.mxu0 0.0
    %1200 = vmatprep.subr.mxu0 0.0
    %1201 = vmatpush1.xpose.msra.mxu0 0.0
    %1202 = vmatprep.subr.mxu0 0.0
    %1203 = vmatpush1.xpose.msra.mxu0 0.0
    %1204 = vmatprep.subr.mxu0 0.0
    %1205 = vmatpush1.xpose.msra.mxu0 0.0
    %1206 = vmatprep.subr.mxu0 0.0
    %1207 = vmatpush1.xpose.msra.mxu0 0.0
    %1208 = vmatprep.subr.mxu0 0.0
    %1209 = vmatpush1.xpose.msra.mxu0 0.0
    %1210 = vmatprep.subr.mxu0 0.0
    %1211 = vmatpush1.xpose.msra.mxu0 0.0
    %1212 = vmatprep.subr.mxu0 0.0
    %1213 = vmatpush1.xpose.msra.mxu0 0.0
    %1214 = vmatprep.mubr.f32.mxu0 %v1143
    %1215 = vmatmul.mubr.f32.gmra.mrb[0].mxu0 %v1142
    %v1216 = vpop.f32.mrb[0].mxu0
    %v1217 = vadd.f32 %v1148, %v1216
    %v1218 = vpop.f32.mrb[0].mxu0
    %1219 = vdwg.mxu0
    %1220 = vst [vmem:[#allocation8] sm:$0xff] %v1217
    // Predicated region
    $region46: #{tpu_custom_call.1} parent=1 // pred_check
      _
    $region47: #{tpu_custom_call.1} parent=1 // pred_check_branch
      %1222 = sbr.rel (0) target = $region49
    $region48: #{tpu_custom_call.1} parent=1 // pred_region
      %s1224 = ssub.s32 128, 128
      %1225 = vsyncadd [#allocation4], %s1224
      %s1227 = sshll.u32 [#allocation8], 4
      %s1228 = int_to_ptr.vmem [resolvable:$true] %s1227
      %1230 = dma.vmem_to_hbm [thread:$0]  %s1228, 128, %s8, [#allocation4]
    $region49: #{tpu_custom_call.1} parent=1 // pred_fallthru
      _
    // Predicated region
    $region50: #{tpu_custom_call.1} parent=1 // pred_check
      _
    $region51: #{tpu_custom_call.1} parent=1 // pred_check_branch
      %1232 = sbr.rel (0) target = $region53
    $region52: #{tpu_custom_call.1} parent=1 // pred_region
      %1233 = dma.done [#allocation4], 128
    $region53: #{tpu_custom_call.1} parent=1 // pred_fallthru
      _
    %1234 = vsyncpa [#allocation3], 1
    %1235 = vsyncpa [#allocation6], 1
    %1236 = vsyncpa [#allocation4], 1

</llo_original>
